<compile_context>
chip_gen: v7x
topology: tpu7x:2x2x1
jax: 0.10.0
libtpu: 0.0.40
codegen_flags: <defaults>
</compile_context>

<pallas_src>
import math

import jax
import jax.numpy as jnp
from jax.experimental import pallas as pl
from jax.experimental.pallas import tpu as pltpu


def _round_up(n, m):
    return (n + m - 1) // m * m


def _vmem_capacity_bytes():
    try:
        return int(pltpu.get_tpu_info().vmem_capacity_bytes)
    except Exception:
        return 64 * 2**20  # conservative (v7x per-core VMEM)


def swiglu_kernel(x_ref, w1_ref, b1_ref, w2_ref, b2_ref, w3_ref, b3_ref,
                  o_ref, acc_ref):
    """One (row-tile, hidden-chunk) grid step of SwiGLU.

    x_ref  : (TM, Dp)   bf16 activations
    w1_ref : (Dp, Hc)   bf16 gate weights chunk (zero-padded)
    b1_ref : (1, Hc)    f32 gate bias chunk
    w2_ref : (Dp, Hc)   bf16 value weights chunk
    b2_ref : (1, Hc)    f32 value bias chunk
    w3_ref : (Hc, Dop)  bf16 output weights chunk (zero-padded rows/cols)
    b3_ref : (1, Dop)   f32 output bias
    o_ref  : (TM, Dop)  output
    acc_ref: (TM, Dop)  f32 accumulator scratch (persists across the H-chunk axis)
    """
    j = pl.program_id(1)

    @pl.when(j == 0)
    def _init():
        acc_ref[...] = jnp.zeros_like(acc_ref)

    x = x_ref[...]  # bf16, fed straight to the MXU

    # Gate / value projections for this hidden chunk (f32 accumulation).
    h1 = jnp.dot(x, w1_ref[...], preferred_element_type=jnp.float32) + b1_ref[...]
    h2 = jnp.dot(x, w2_ref[...], preferred_element_type=jnp.float32) + b2_ref[...]

    # SiLU(h1) * h2 in f32 on the VPU/EUP.
    hidden = (h1 * jax.nn.sigmoid(h1)) * h2

    # Partial output projection, accumulated in f32.
    acc_ref[...] += jnp.dot(hidden.astype(jnp.bfloat16), w3_ref[...],
                            preferred_element_type=jnp.float32)

    @pl.when(j == pl.num_programs(1) - 1)
    def _finalize():
        o_ref[...] = (acc_ref[...] + b3_ref[...]).astype(o_ref.dtype)


def prepare_swiglu_params(params, *, h_chunk=None, vmem_cap=None):
    """One-time weight prep: pad to lane-aligned dims, cast to bf16, pick H-chunking.

    Zero-padded w1/w2 columns + zero biases give hidden = silu(0)*0 = 0, and the
    matching padded w3 rows are zero, so padding is numerically exact.
    """
    w1, b1 = params["w1"], params["b1"]
    w2, b2 = params["w2"], params["b2"]
    w3, b3 = params["w3"], params["b3"]
    d_in, hidden = w1.shape
    d_out = w3.shape[1]

    dp = _round_up(d_in, 128)
    dop = _round_up(d_out, 128)
    hp = _round_up(hidden, 128)

    if vmem_cap is None:
        vmem_cap = _vmem_capacity_bytes()

    if h_chunk is not None:
        hc = min(_round_up(min(h_chunk, hp), 128), hp)
    else:
        # Keep weights fully VMEM-resident (single-buffered) when they fit;
        # otherwise chunk the hidden dim so each double-buffered chunk fits.
        resident_bytes = (dp * 2 * hp + hp * dop) * 2            # bf16 w1 + w2 + w3
        budget = int(0.45 * vmem_cap)
        if resident_bytes <= budget:
            hc = hp
        else:
            per_col = 2 * (2 * dp + dop) * 2                      # bytes / hidden col, x2 bufs
            hc = max(128, (budget // per_col) // 128 * 128)
            hc = min(hc, hp)

    hp = _round_up(hidden, hc)
    n_chunks = hp // hc

    def pad2(w, r, c):
        return jnp.pad(w.astype(jnp.float32),
                       ((0, r - w.shape[0]), (0, c - w.shape[1])))

    def padb(b, c):
        b = b.reshape(1, -1).astype(jnp.float32)
        return jnp.pad(b, ((0, 0), (0, c - b.shape[1])))

    return {
        "w1": pad2(w1, dp, hp).astype(jnp.bfloat16),
        "b1": padb(b1, hp),
        "w2": pad2(w2, dp, hp).astype(jnp.bfloat16),
        "b2": padb(b2, hp),
        "w3": pad2(w3, hp, dop).astype(jnp.bfloat16),
        "b3": padb(b3, dop),
        "meta": dict(d_in=d_in, hidden=hidden, d_out=d_out,
                     dp=dp, hp=hp, dop=dop, hc=hc, n_chunks=n_chunks,
                     vmem_cap=vmem_cap),
    }


def swiglu_forward(x, prep, *, row_tile=512):
    """SwiGLU forward. x: (..., in_features) -> (..., out_features)."""
    meta = prep["meta"]
    d_in, d_out = meta["d_in"], meta["d_out"]
    dp, dop = meta["dp"], meta["dop"]
    hc, n_chunks = meta["hc"], meta["n_chunks"]
    vmem_cap = meta["vmem_cap"]

    *lead, dx = x.shape
    assert dx == d_in, f"expected last dim {d_in}, got {dx}"
    rows = math.prod(lead) if lead else 1
    out_dtype = x.dtype

    # bf16 activation streaming: half the x DMA + VMEM, native MXU operand packing.
    x2d = x.reshape(rows, d_in).astype(jnp.bfloat16)
    if d_in != dp:                      # only pad the lane dim when needed
        x2d = jnp.pad(x2d, ((0, 0), (0, dp - d_in)))

    # Row tile: large to amortize per-step overhead, clamped for tiny inputs,
    # auto-shrunk if the per-step VMEM estimate would not fit the budget.
    rt = _round_up(min(row_tile, _round_up(rows, 8)), 8)
    weights_resident = (n_chunks == 1)

    def vmem_estimate(rt_, w_buf):
        return (
            2 * rt_ * dp * 2                           # x tiles (bf16, double-buffered)
            + 2 * rt_ * dop * jnp.dtype(out_dtype).itemsize  # out tiles
            + rt_ * dop * 4                            # f32 accumulator scratch
            + w_buf * (dp * 2 * hc + hc * dop) * 2     # bf16 weight chunk(s)
            + w_buf * (2 * hc + dop) * 4               # biases
            + rt_ * hc * (3 * 4 + 2)                   # h1/h2/hidden f32 + bf16 hidden
        )

    budget = int(0.75 * vmem_cap)                      # ~48 MiB v7x, ~96 MiB v5e/v6e
    w_buf_intended = 1 if weights_resident else 2
    while rt > 64 and vmem_estimate(rt, w_buf_intended) > budget:
        rt = _round_up(rt // 2, 8)

    def run(single_buffer_const):
        w_buf = 1 if (weights_resident and single_buffer_const) else 2
        vmem_limit = min(budget, max(32 * 2**20, int(1.4 * vmem_estimate(rt, w_buf))))

        def spec(shape, index_map, constant=False):
            # Grid-invariant blocks only need a single VMEM buffer.
            if constant and single_buffer_const:
                return pl.BlockSpec(shape, index_map, pipeline_mode=pl.Buffered(1))
            return pl.BlockSpec(shape, index_map)

        return pl.pallas_call(
            swiglu_kernel,
            out_shape=jax.ShapeDtypeStruct((rows, dop), out_dtype),
            grid_spec=pltpu.PrefetchScalarGridSpec(
                num_scalar_prefetch=0,
                grid=(pl.cdiv(rows, rt), n_chunks),
                in_specs=[
                    pl.BlockSpec((rt, dp), lambda i, j: (i, 0)),            # x rows
                    spec((dp, hc), lambda i, j: (0, j), weights_resident),  # w1 chunk
                    spec((1, hc), lambda i, j: (0, j), weights_resident),   # b1 chunk
                    spec((dp, hc), lambda i, j: (0, j), weights_resident),  # w2 chunk
                    spec((1, hc), lambda i, j: (0, j), weights_resident),   # b2 chunk
                    spec((hc, dop), lambda i, j: (j, 0), weights_resident), # w3 chunk
                    spec((1, dop), lambda i, j: (0, 0), True),              # b3 (const)
                ],
                out_specs=pl.BlockSpec((rt, dop), lambda i, j: (i, 0)),
                scratch_shapes=[pltpu.VMEM((rt, dop), jnp.float32)],
            ),
            compiler_params=pltpu.CompilerParams(
                dimension_semantics=("parallel", "arbitrary"),
                vmem_limit_bytes=vmem_limit,
            ),
        )(x2d, prep["w1"], prep["b1"], prep["w2"], prep["b2"],
          prep["w3"], prep["b3"])

    try:
        out = run(True)
    except Exception:
        # Fallback if pl.Buffered(1) single-buffering is unsupported by this build:
        # default double-buffered specs (same numerics, more VMEM).
        out = run(False)

    if dop != d_out:
        out = out[:, :d_out]
    return out.reshape(*lead, d_out)


def make_params(key, in_features, hidden_features, out_features):
    """Synthetic nn.Linear-style parameters (weights stored as (in, out))."""
    ks = jax.random.split(key, 6)
    s_in = 1.0 / jnp.sqrt(in_features)
    s_h = 1.0 / jnp.sqrt(hidden_features)
    return {
        "w1": jax.random.normal(ks[0], (in_features, hidden_features), jnp.float32) * s_in,
        "b1": jax.random.normal(ks[1], (hidden_features,), jnp.float32) * 0.01,
        "w2": jax.random.normal(ks[2], (in_features, hidden_features), jnp.float32) * s_in,
        "b2": jax.random.normal(ks[3], (hidden_features,), jnp.float32) * 0.01,
        "w3": jax.random.normal(ks[4], (hidden_features, out_features), jnp.float32) * s_h,
        "b3": jax.random.normal(ks[5], (out_features,), jnp.float32) * 0.01,
    }


def swiglu_ref(x, p):
    """Pure-JAX f32 reference (matches the PyTorch module)."""
    h1 = x @ p["w1"] + p["b1"]
    h2 = x @ p["w2"] + p["b2"]
    hidden = jax.nn.silu(h1) * h2
    return hidden @ p["w3"] + p["b3"]


if __name__ == "__main__":
    key = jax.random.PRNGKey(0)
    kx, kp = jax.random.split(key)

    # Small shapes consistent with the module: (batch, seq, in_features).
    B, L, D = 2, 8, 128
    H = D * 4 * 2 // 3            # typical SwiGLU hidden size (341 -> padded to 384)
    Do = D

    x = jax.random.normal(kx, (B, L, D), jnp.float32)
    params = make_params(kp, D, H, Do)

    # Path 1: weights fully VMEM-resident (single H chunk, single-buffered).
    prep = prepare_swiglu_params(params)
    out = jax.block_until_ready(swiglu_forward(x, prep))
    ref = swiglu_ref(x, params)
    assert out.shape == (B, L, Do)
    # bf16 matmul operands -> loosened tolerance vs. the f32 reference.
    assert jnp.allclose(out, ref, atol=5e-2, rtol=5e-2), "mismatch (resident path)"

    # Path 2: forced H-chunked accumulator path (large-weight / v7x regime) on a
    # ragged row count to also exercise the cdiv/masked last row tile.
    x_r = x[:, :5, :]                                  # rows = 10 (ragged vs rt)
    prep_c = prepare_swiglu_params(params, h_chunk=128)
    out_c = jax.block_until_ready(swiglu_forward(x_r, prep_c))
    ref_c = swiglu_ref(x_r, params)
    assert out_c.shape == x_r.shape[:-1] + (Do,)
    assert jnp.allclose(out_c, ref_c, atol=5e-2, rtol=5e-2), "mismatch (chunked path)"

    print("KERNEL_OK")
</pallas_src>

<mosaic_0001>
module attributes {stable_mosaic.version = 11 : i64} {
  func.func @swiglu_kernel(%arg0: i32, %arg1: i32, %arg2: memref<16x128xbf16, #tpu.memory_space<vmem>>, %arg3: memref<128x384xbf16, #tpu.memory_space<vmem>>, %arg4: memref<1x384xf32, #tpu.memory_space<vmem>>, %arg5: memref<128x384xbf16, #tpu.memory_space<vmem>>, %arg6: memref<1x384xf32, #tpu.memory_space<vmem>>, %arg7: memref<384x128xbf16, #tpu.memory_space<vmem>>, %arg8: memref<1x128xf32, #tpu.memory_space<vmem>>, %arg9: memref<16x128xf32, #tpu.memory_space<vmem>>, %arg10: memref<16x128xf32, #tpu.memory_space<vmem>>) attributes {dimension_semantics = [#tpu.dimension_semantics<parallel>, #tpu.dimension_semantics<arbitrary>], iteration_bounds = array<i64: 1, 1>, scalar_prefetch = 0 : i64, scratch_operands = 1 : i64, tpu.core_type = #tpu.core_type<tc>, window_params = [{transform_indices = @transform_0, window_bounds = array<i64: 16, 128>}, {pipeline_mode = #tpu.pipeline_mode<synchronous>, transform_indices = @transform_1, window_bounds = array<i64: 128, 384>}, {pipeline_mode = #tpu.pipeline_mode<synchronous>, transform_indices = @transform_2, window_bounds = array<i64: 1, 384>}, {pipeline_mode = #tpu.pipeline_mode<synchronous>, transform_indices = @transform_3, window_bounds = array<i64: 128, 384>}, {pipeline_mode = #tpu.pipeline_mode<synchronous>, transform_indices = @transform_4, window_bounds = array<i64: 1, 384>}, {pipeline_mode = #tpu.pipeline_mode<synchronous>, transform_indices = @transform_5, window_bounds = array<i64: 384, 128>}, {pipeline_mode = #tpu.pipeline_mode<synchronous>, transform_indices = @transform_6, window_bounds = array<i64: 1, 128>}, {transform_indices = @transform_7, window_bounds = array<i64: 16, 128>}]} {
    %c0_i32 = arith.constant 0 : i32
    %0 = arith.cmpi eq, %arg1, %c0_i32 : i32
    %1 = arith.extui %0 : i1 to i32
    %c0_i32_0 = arith.constant 0 : i32
    %2 = arith.cmpi ne, %1, %c0_i32_0 : i32
    scf.if %2 {
      %cst_21 = arith.constant 0.000000e+00 : f32
      %30 = vector.broadcast %cst_21 : f32 to vector<16x128xf32>
      %c0_22 = arith.constant 0 : index
      %c0_23 = arith.constant 0 : index
      %31 = vector.load %arg10[%c0_22, %c0_23] : memref<16x128xf32, #tpu.memory_space<vmem>>, vector<16x128xf32>
      tpu.vector_store %arg10[%c0_22, %c0_23], %30 {strides = array<i32>} : memref<16x128xf32, #tpu.memory_space<vmem>>, vector<16x128xf32>,
    } else {
    }
    %c0 = arith.constant 0 : index
    %c0_1 = arith.constant 0 : index
    %3 = vector.load %arg2[%c0, %c0_1] : memref<16x128xbf16, #tpu.memory_space<vmem>>, vector<16x128xbf16>
    %c0_2 = arith.constant 0 : index
    %c0_3 = arith.constant 0 : index
    %4 = vector.load %arg3[%c0_2, %c0_3] : memref<128x384xbf16, #tpu.memory_space<vmem>>, vector<128x384xbf16>
    %cst = arith.constant dense<0.000000e+00> : vector<16x384xf32>
    %5 = tpu.matmul %3, %4, %cst {dimension_numbers = #tpu.dot_dimension_numbers<[1], [0], [0], [1], [0, 0, 1, 1], [], []>} : vector<16x128xbf16>, vector<128x384xbf16>, vector<16x384xf32> -> vector<16x384xf32>
    %c0_4 = arith.constant 0 : index
    %c0_5 = arith.constant 0 : index
    %6 = vector.load %arg4[%c0_4, %c0_5] : memref<1x384xf32, #tpu.memory_space<vmem>>, vector<1x384xf32>
    %7 = vector.broadcast %6 : vector<1x384xf32> to vector<16x384xf32>
    %8 = arith.addf %5, %7 : vector<16x384xf32>
    %c0_6 = arith.constant 0 : index
    %c0_7 = arith.constant 0 : index
    %9 = vector.load %arg5[%c0_6, %c0_7] : memref<128x384xbf16, #tpu.memory_space<vmem>>, vector<128x384xbf16>
    %cst_8 = arith.constant dense<0.000000e+00> : vector<16x384xf32>
    %10 = tpu.matmul %3, %9, %cst_8 {dimension_numbers = #tpu.dot_dimension_numbers<[1], [0], [0], [1], [0, 0, 1, 1], [], []>} : vector<16x128xbf16>, vector<128x384xbf16>, vector<16x384xf32> -> vector<16x384xf32>
    %c0_9 = arith.constant 0 : index
    %c0_10 = arith.constant 0 : index
    %11 = vector.load %arg6[%c0_9, %c0_10] : memref<1x384xf32, #tpu.memory_space<vmem>>, vector<1x384xf32>
    %12 = vector.broadcast %11 : vector<1x384xf32> to vector<16x384xf32>
    %13 = arith.addf %10, %12 : vector<16x384xf32>
    %14 = arith.negf %8 : vector<16x384xf32>
    %15 = math.exp %14 : vector<16x384xf32>
    %cst_11 = arith.constant 1.000000e+00 : f32
    %16 = vector.broadcast %cst_11 : f32 to vector<16x384xf32>
    %17 = arith.addf %16, %15 : vector<16x384xf32>
    %18 = arith.divf %16, %17 : vector<16x384xf32>
    %19 = arith.mulf %8, %18 : vector<16x384xf32>
    %20 = arith.mulf %19, %13 : vector<16x384xf32>
    %c0_12 = arith.constant 0 : index
    %c0_13 = arith.constant 0 : index
    %21 = vector.load %arg10[%c0_12, %c0_13] : memref<16x128xf32, #tpu.memory_space<vmem>>, vector<16x128xf32>
    %22 = arith.truncf %20 : vector<16x384xf32> to vector<16x384xbf16>
    %c0_14 = arith.constant 0 : index
    %c0_15 = arith.constant 0 : index
    %23 = vector.load %arg7[%c0_14, %c0_15] : memref<384x128xbf16, #tpu.memory_space<vmem>>, vector<384x128xbf16>
    %cst_16 = arith.constant dense<0.000000e+00> : vector<16x128xf32>
    %24 = tpu.matmul %22, %23, %cst_16 {dimension_numbers = #tpu.dot_dimension_numbers<[1], [0], [0], [1], [0, 0, 1, 1], [], []>} : vector<16x384xbf16>, vector<384x128xbf16>, vector<16x128xf32> -> vector<16x128xf32>
    %25 = arith.addf %21, %24 : vector<16x128xf32>
    %c0_17 = arith.constant 0 : index
    %c0_18 = arith.constant 0 : index
    %26 = vector.load %arg10[%c0_17, %c0_18] : memref<16x128xf32, #tpu.memory_space<vmem>>, vector<16x128xf32>
    tpu.vector_store %arg10[%c0_17, %c0_18], %25 {strides = array<i32>} : memref<16x128xf32, #tpu.memory_space<vmem>>, vector<16x128xf32>,
    %c0_i32_19 = arith.constant 0 : i32
    %27 = arith.cmpi eq, %arg1, %c0_i32_19 : i32
    %28 = arith.extui %27 : i1 to i32
    %c0_i32_20 = arith.constant 0 : i32
    %29 = arith.cmpi ne, %28, %c0_i32_20 : i32
    scf.if %29 {
      %c0_21 = arith.constant 0 : index
      %c0_22 = arith.constant 0 : index
      %30 = vector.load %arg10[%c0_21, %c0_22] : memref<16x128xf32, #tpu.memory_space<vmem>>, vector<16x128xf32>
      %c0_23 = arith.constant 0 : index
      %c0_24 = arith.constant 0 : index
      %31 = vector.load %arg8[%c0_23, %c0_24] : memref<1x128xf32, #tpu.memory_space<vmem>>, vector<1x128xf32>
      %32 = vector.broadcast %31 : vector<1x128xf32> to vector<16x128xf32>
      %33 = arith.addf %30, %32 : vector<16x128xf32>
      %c0_25 = arith.constant 0 : index
      %c0_26 = arith.constant 0 : index
      %34 = vector.load %arg9[%c0_25, %c0_26] : memref<16x128xf32, #tpu.memory_space<vmem>>, vector<16x128xf32>
      tpu.vector_store %arg9[%c0_25, %c0_26], %33 {strides = array<i32>} : memref<16x128xf32, #tpu.memory_space<vmem>>, vector<16x128xf32>,
    } else {
    }
    return
  }
  func.func @transform_0(%arg0: i32, %arg1: i32) -> (i32, i32) {
    %c0_i32 = arith.constant 0 : i32
    %c0_i32_0 = arith.constant 0 : i32
    return %arg0, %c0_i32 : i32, i32
  }
  func.func @transform_1(%arg0: i32, %arg1: i32) -> (i32, i32) {
    %c0_i32 = arith.constant 0 : i32
    %c0_i32_0 = arith.constant 0 : i32
    return %c0_i32, %arg1 : i32, i32
  }
  func.func @transform_2(%arg0: i32, %arg1: i32) -> (i32, i32) {
    %c0_i32 = arith.constant 0 : i32
    %c0_i32_0 = arith.constant 0 : i32
    return %c0_i32, %arg1 : i32, i32
  }
  func.func @transform_3(%arg0: i32, %arg1: i32) -> (i32, i32) {
    %c0_i32 = arith.constant 0 : i32
    %c0_i32_0 = arith.constant 0 : i32
    return %c0_i32, %arg1 : i32, i32
  }
  func.func @transform_4(%arg0: i32, %arg1: i32) -> (i32, i32) {
    %c0_i32 = arith.constant 0 : i32
    %c0_i32_0 = arith.constant 0 : i32
    return %c0_i32, %arg1 : i32, i32
  }
  func.func @transform_5(%arg0: i32, %arg1: i32) -> (i32, i32) {
    %c0_i32 = arith.constant 0 : i32
    %c0_i32_0 = arith.constant 0 : i32
    return %arg1, %c0_i32 : i32, i32
  }
  func.func @transform_6(%arg0: i32, %arg1: i32) -> (i32, i32) {
    %c0_i32 = arith.constant 0 : i32
    %c0_i32_0 = arith.constant 0 : i32
    %c0_i32_1 = arith.constant 0 : i32
    return %c0_i32, %c0_i32_0 : i32, i32
  }
  func.func @transform_7(%arg0: i32, %arg1: i32) -> (i32, i32) {
    %c0_i32 = arith.constant 0 : i32
    %c0_i32_0 = arith.constant 0 : i32
    return %arg0, %c0_i32 : i32, i32
  }
}

module attributes {stable_mosaic.version = 11 : i64} {
  func.func @swiglu_kernel(%arg0: i32, %arg1: i32, %arg2: memref<16x128xbf16, #tpu.memory_space<vmem>>, %arg3: memref<128x384xbf16, #tpu.memory_space<vmem>>, %arg4: memref<1x384xf32, #tpu.memory_space<vmem>>, %arg5: memref<128x384xbf16, #tpu.memory_space<vmem>>, %arg6: memref<1x384xf32, #tpu.memory_space<vmem>>, %arg7: memref<384x128xbf16, #tpu.memory_space<vmem>>, %arg8: memref<1x128xf32, #tpu.memory_space<vmem>>, %arg9: memref<16x128xf32, #tpu.memory_space<vmem>>, %arg10: memref<16x128xf32, #tpu.memory_space<vmem>>) attributes {dimension_semantics = [#tpu.dimension_semantics<parallel>, #tpu.dimension_semantics<arbitrary>], iteration_bounds = array<i64: 1, 1>, scalar_prefetch = 0 : i64, scratch_operands = 1 : i64, tpu.core_type = #tpu.core_type<tc>, window_params = [{transform_indices = @transform_0, window_bounds = array<i64: 16, 128>}, {transform_indices = @transform_1, window_bounds = array<i64: 128, 384>}, {transform_indices = @transform_2, window_bounds = array<i64: 1, 384>}, {transform_indices = @transform_3, window_bounds = array<i64: 128, 384>}, {transform_indices = @transform_4, window_bounds = array<i64: 1, 384>}, {transform_indices = @transform_5, window_bounds = array<i64: 384, 128>}, {pipeline_mode = #tpu.pipeline_mode<synchronous>, transform_indices = @transform_6, window_bounds = array<i64: 1, 128>}, {transform_indices = @transform_7, window_bounds = array<i64: 16, 128>}]} {
    %c0_i32 = arith.constant 0 : i32
    %0 = arith.cmpi eq, %arg1, %c0_i32 : i32
    %1 = arith.extui %0 : i1 to i32
    %c0_i32_0 = arith.constant 0 : i32
    %2 = arith.cmpi ne, %1, %c0_i32_0 : i32
    scf.if %2 {
      %cst_21 = arith.constant 0.000000e+00 : f32
      %30 = vector.broadcast %cst_21 : f32 to vector<16x128xf32>
      %c0_22 = arith.constant 0 : index
      %c0_23 = arith.constant 0 : index
      %31 = vector.load %arg10[%c0_22, %c0_23] : memref<16x128xf32, #tpu.memory_space<vmem>>, vector<16x128xf32>
      tpu.vector_store %arg10[%c0_22, %c0_23], %30 {strides = array<i32>} : memref<16x128xf32, #tpu.memory_space<vmem>>, vector<16x128xf32>,
    } else {
    }
    %c0 = arith.constant 0 : index
    %c0_1 = arith.constant 0 : index
    %3 = vector.load %arg2[%c0, %c0_1] : memref<16x128xbf16, #tpu.memory_space<vmem>>, vector<16x128xbf16>
    %c0_2 = arith.constant 0 : index
    %c0_3 = arith.constant 0 : index
    %4 = vector.load %arg3[%c0_2, %c0_3] : memref<128x384xbf16, #tpu.memory_space<vmem>>, vector<128x384xbf16>
    %cst = arith.constant dense<0.000000e+00> : vector<16x384xf32>
    %5 = tpu.matmul %3, %4, %cst {dimension_numbers = #tpu.dot_dimension_numbers<[1], [0], [0], [1], [0, 0, 1, 1], [], []>} : vector<16x128xbf16>, vector<128x384xbf16>, vector<16x384xf32> -> vector<16x384xf32>
    %c0_4 = arith.constant 0 : index
    %c0_5 = arith.constant 0 : index
    %6 = vector.load %arg4[%c0_4, %c0_5] : memref<1x384xf32, #tpu.memory_space<vmem>>, vector<1x384xf32>
    %7 = vector.broadcast %6 : vector<1x384xf32> to vector<16x384xf32>
    %8 = arith.addf %5, %7 : vector<16x384xf32>
    %c0_6 = arith.constant 0 : index
    %c0_7 = arith.constant 0 : index
    %9 = vector.load %arg5[%c0_6, %c0_7] : memref<128x384xbf16, #tpu.memory_space<vmem>>, vector<128x384xbf16>
    %cst_8 = arith.constant dense<0.000000e+00> : vector<16x384xf32>
    %10 = tpu.matmul %3, %9, %cst_8 {dimension_numbers = #tpu.dot_dimension_numbers<[1], [0], [0], [1], [0, 0, 1, 1], [], []>} : vector<16x128xbf16>, vector<128x384xbf16>, vector<16x384xf32> -> vector<16x384xf32>
    %c0_9 = arith.constant 0 : index
    %c0_10 = arith.constant 0 : index
    %11 = vector.load %arg6[%c0_9, %c0_10] : memref<1x384xf32, #tpu.memory_space<vmem>>, vector<1x384xf32>
    %12 = vector.broadcast %11 : vector<1x384xf32> to vector<16x384xf32>
    %13 = arith.addf %10, %12 : vector<16x384xf32>
    %14 = arith.negf %8 : vector<16x384xf32>
    %15 = math.exp %14 : vector<16x384xf32>
    %cst_11 = arith.constant 1.000000e+00 : f32
    %16 = vector.broadcast %cst_11 : f32 to vector<16x384xf32>
    %17 = arith.addf %16, %15 : vector<16x384xf32>
    %18 = arith.divf %16, %17 : vector<16x384xf32>
    %19 = arith.mulf %8, %18 : vector<16x384xf32>
    %20 = arith.mulf %19, %13 : vector<16x384xf32>
    %c0_12 = arith.constant 0 : index
    %c0_13 = arith.constant 0 : index
    %21 = vector.load %arg10[%c0_12, %c0_13] : memref<16x128xf32, #tpu.memory_space<vmem>>, vector<16x128xf32>
    %22 = arith.truncf %20 : vector<16x384xf32> to vector<16x384xbf16>
    %c0_14 = arith.constant 0 : index
    %c0_15 = arith.constant 0 : index
    %23 = vector.load %arg7[%c0_14, %c0_15] : memref<384x128xbf16, #tpu.memory_space<vmem>>, vector<384x128xbf16>
    %cst_16 = arith.constant dense<0.000000e+00> : vector<16x128xf32>
    %24 = tpu.matmul %22, %23, %cst_16 {dimension_numbers = #tpu.dot_dimension_numbers<[1], [0], [0], [1], [0, 0, 1, 1], [], []>} : vector<16x384xbf16>, vector<384x128xbf16>, vector<16x128xf32> -> vector<16x128xf32>
    %25 = arith.addf %21, %24 : vector<16x128xf32>
    %c0_17 = arith.constant 0 : index
    %c0_18 = arith.constant 0 : index
    %26 = vector.load %arg10[%c0_17, %c0_18] : memref<16x128xf32, #tpu.memory_space<vmem>>, vector<16x128xf32>
    tpu.vector_store %arg10[%c0_17, %c0_18], %25 {strides = array<i32>} : memref<16x128xf32, #tpu.memory_space<vmem>>, vector<16x128xf32>,
    %c0_i32_19 = arith.constant 0 : i32
    %27 = arith.cmpi eq, %arg1, %c0_i32_19 : i32
    %28 = arith.extui %27 : i1 to i32
    %c0_i32_20 = arith.constant 0 : i32
    %29 = arith.cmpi ne, %28, %c0_i32_20 : i32
    scf.if %29 {
      %c0_21 = arith.constant 0 : index
      %c0_22 = arith.constant 0 : index
      %30 = vector.load %arg10[%c0_21, %c0_22] : memref<16x128xf32, #tpu.memory_space<vmem>>, vector<16x128xf32>
      %c0_23 = arith.constant 0 : index
      %c0_24 = arith.constant 0 : index
      %31 = vector.load %arg8[%c0_23, %c0_24] : memref<1x128xf32, #tpu.memory_space<vmem>>, vector<1x128xf32>
      %32 = vector.broadcast %31 : vector<1x128xf32> to vector<16x128xf32>
      %33 = arith.addf %30, %32 : vector<16x128xf32>
      %c0_25 = arith.constant 0 : index
      %c0_26 = arith.constant 0 : index
      %34 = vector.load %arg9[%c0_25, %c0_26] : memref<16x128xf32, #tpu.memory_space<vmem>>, vector<16x128xf32>
      tpu.vector_store %arg9[%c0_25, %c0_26], %33 {strides = array<i32>} : memref<16x128xf32, #tpu.memory_space<vmem>>, vector<16x128xf32>,
    } else {
    }
    return
  }
  func.func @transform_0(%arg0: i32, %arg1: i32) -> (i32, i32) {
    %c0_i32 = arith.constant 0 : i32
    %c0_i32_0 = arith.constant 0 : i32
    return %arg0, %c0_i32 : i32, i32
  }
  func.func @transform_1(%arg0: i32, %arg1: i32) -> (i32, i32) {
    %c0_i32 = arith.constant 0 : i32
    %c0_i32_0 = arith.constant 0 : i32
    return %c0_i32, %arg1 : i32, i32
  }
  func.func @transform_2(%arg0: i32, %arg1: i32) -> (i32, i32) {
    %c0_i32 = arith.constant 0 : i32
    %c0_i32_0 = arith.constant 0 : i32
    return %c0_i32, %arg1 : i32, i32
  }
  func.func @transform_3(%arg0: i32, %arg1: i32) -> (i32, i32) {
    %c0_i32 = arith.constant 0 : i32
    %c0_i32_0 = arith.constant 0 : i32
    return %c0_i32, %arg1 : i32, i32
  }
  func.func @transform_4(%arg0: i32, %arg1: i32) -> (i32, i32) {
    %c0_i32 = arith.constant 0 : i32
    %c0_i32_0 = arith.constant 0 : i32
    return %c0_i32, %arg1 : i32, i32
  }
  func.func @transform_5(%arg0: i32, %arg1: i32) -> (i32, i32) {
    %c0_i32 = arith.constant 0 : i32
    %c0_i32_0 = arith.constant 0 : i32
    return %arg1, %c0_i32 : i32, i32
  }
  func.func @transform_6(%arg0: i32, %arg1: i32) -> (i32, i32) {
    %c0_i32 = arith.constant 0 : i32
    %c0_i32_0 = arith.constant 0 : i32
    %c0_i32_1 = arith.constant 0 : i32
    return %c0_i32, %c0_i32_0 : i32, i32
  }
  func.func @transform_7(%arg0: i32, %arg1: i32) -> (i32, i32) {
    %c0_i32 = arith.constant 0 : i32
    %c0_i32_0 = arith.constant 0 : i32
    return %arg0, %c0_i32 : i32, i32
  }
}

</mosaic_0001>

<llo_original>
// kernel: tpu_custom_call.1
$region0: #{tpu_custom_call.1}
  #allocation0 [shape = 'u32[]', space=smem, size = 0x4, offset = 0x4, fixed_abs, tag = 'smem constant byte address 0x4 - core index']
  #allocation1 [shape = 'u32[144,128]{1,0:T(1,128)}', space=vmem, size = 0x12000, scoped, tag = 'internal scratch']
  #allocation2 [shape = 'f32[16,128]{1,0:T(8,128)}', space=vmem, size = 0x2000, scoped, tag = 'scratch operand']
  %s0 = inlined_call_operand.hbm [shape: bf16[16,128], index: 0, kind: input, shape index: {}]
  %s1 = inlined_call_operand.hbm [shape: bf16[128,384], index: 1, kind: input, shape index: {}]
  %s2 = inlined_call_operand.vmem [shape: f32[1,384], index: 2, kind: input, shape index: {}]
  %s3 = inlined_call_operand.hbm [shape: bf16[128,384], index: 3, kind: input, shape index: {}]
  %s4 = inlined_call_operand.vmem [shape: f32[1,384], index: 4, kind: input, shape index: {}]
  %s5 = inlined_call_operand.hbm [shape: bf16[384,128], index: 5, kind: input, shape index: {}]
  %s6 = inlined_call_operand.vmem [shape: f32[1,128], index: 6, kind: input, shape index: {}]
  %s7 = inlined_call_operand.hbm [shape: f32[16,128], index: 7, kind: output, shape index: {}]
  %s8 = sld [smem:[#allocation0]]
  $region62: #{tpu_custom_call.1} parent=0
    _
  %s10 = ssub.s32 1, %s8
  %s11 = scalar_select 0, %s10, %s8
  $region1: #{tpu_custom_call.1} parent=0
    #allocation3 [shape = 'u8[4096]{0}', space=vmem, size = 0x1000, scoped, tag = 'input window, operand 0, single buffered']
    #allocation4 [shape = 's32[1]{0}', space=sflag, size = 0x4, scoped, tag = 'scoped memory for tpu_custom_call.1']
    #allocation5 [shape = 's32[1]{0}', space=sflag, size = 0x4, scoped, tag = 'scoped memory for tpu_custom_call.1']
    #allocation6 [shape = 'u8[98304]{0}', space=vmem, size = 0x18000, scoped, tag = 'input window, operand 1, single buffered']
    #allocation7 [shape = 's32[1]{0}', space=sflag, size = 0x4, scoped, tag = 'scoped memory for tpu_custom_call.1']
    #allocation8 [shape = 'u8[98304]{0}', space=vmem, size = 0x18000, scoped, tag = 'input window, operand 3, single buffered']
    #allocation9 [shape = 'u8[98304]{0}', space=vmem, size = 0x18000, scoped, tag = 'input window, operand 5, single buffered']
    #allocation10 [shape = 's32[1]{0}', space=sflag, size = 0x4, scoped, tag = 'scoped memory for tpu_custom_call.1']
    #allocation11 [shape = 'u8[8192]{0}', space=vmem, size = 0x2000, scoped, tag = 'output window, operand 0, single buffered']
    %12 = vsyncpa [#allocation4], 0
    %13 = vsyncpa [#allocation7], 0
    %14 = vsyncpa [#allocation10], 0
    %15 = vsyncpa [#allocation5], 0
    // Predicated region
    $region2: #{tpu_custom_call.1} parent=1 // pred_check
      _
    $region3: #{tpu_custom_call.1} parent=1 // pred_check_branch
      %17 = sbr.rel (0) target = $region5
    $region4: #{tpu_custom_call.1} parent=1 // pred_region
      %s19 = ssub.s32 128, 128
      %20 = vsyncadd [#allocation4], %s19
      %s21 = sshll.u32 [#allocation3], 4
      %s22 = int_to_ptr.vmem [resolvable:$true] %s21
      %27 = dma.hbm_to_vmem [thread:$0]  %s0, 128, %s22, [#allocation4], 64, 64, 4
    $region5: #{tpu_custom_call.1} parent=1 // pred_fallthru
      _
    // Predicated region
    $region6: #{tpu_custom_call.1} parent=1 // pred_check
      _
    $region7: #{tpu_custom_call.1} parent=1 // pred_check_branch
      %29 = sbr.rel (0) target = $region9
    $region8: #{tpu_custom_call.1} parent=1 // pred_region
      %s31 = ssub.s32 3072, 3072
      %32 = vsyncadd [#allocation7], %s31
      %s33 = sshll.u32 [#allocation6], 4
      %s34 = int_to_ptr.vmem [resolvable:$true] %s33
      %39 = dma.hbm_to_vmem [thread:$0]  %s1, 3072, %s34, [#allocation7], 192, 192, 12
    $region9: #{tpu_custom_call.1} parent=1 // pred_fallthru
      _
    // Predicated region
    $region10: #{tpu_custom_call.1} parent=1 // pred_check
      _
    $region11: #{tpu_custom_call.1} parent=1 // pred_check_branch
      %41 = sbr.rel (0) target = $region13
    $region12: #{tpu_custom_call.1} parent=1 // pred_region
      _
    $region13: #{tpu_custom_call.1} parent=1 // pred_fallthru
      _
    // Predicated region
    $region14: #{tpu_custom_call.1} parent=1 // pred_check
      _
    $region15: #{tpu_custom_call.1} parent=1 // pred_check_branch
      %43 = sbr.rel (0) target = $region17
    $region16: #{tpu_custom_call.1} parent=1 // pred_region
      %s45 = ssub.s32 3072, 3072
      %46 = vsyncadd [#allocation7], %s45
      %s47 = sshll.u32 [#allocation8], 4
      %s48 = int_to_ptr.vmem [resolvable:$true] %s47
      %53 = dma.hbm_to_vmem [thread:$0]  %s3, 3072, %s48, [#allocation7], 192, 192, 12
    $region17: #{tpu_custom_call.1} parent=1 // pred_fallthru
      _
    // Predicated region
    $region18: #{tpu_custom_call.1} parent=1 // pred_check
      _
    $region19: #{tpu_custom_call.1} parent=1 // pred_check_branch
      %55 = sbr.rel (0) target = $region21
    $region20: #{tpu_custom_call.1} parent=1 // pred_region
      _
    $region21: #{tpu_custom_call.1} parent=1 // pred_fallthru
      _
    // Predicated region
    $region22: #{tpu_custom_call.1} parent=1 // pred_check
      _
    $region23: #{tpu_custom_call.1} parent=1 // pred_check_branch
      %57 = sbr.rel (0) target = $region25
    $region24: #{tpu_custom_call.1} parent=1 // pred_region
      %s59 = ssub.s32 3072, 3072
      %60 = vsyncadd [#allocation10], %s59
      %s61 = sshll.u32 [#allocation9], 4
      %s62 = int_to_ptr.vmem [resolvable:$true] %s61
      %67 = dma.hbm_to_vmem [thread:$0]  %s5, 3072, %s62, [#allocation10], 64, 64, 4
    $region25: #{tpu_custom_call.1} parent=1 // pred_fallthru
      _
    // Predicated region
    $region26: #{tpu_custom_call.1} parent=1 // pred_check
      _
    $region27: #{tpu_custom_call.1} parent=1 // pred_check_branch
      %69 = sbr.rel (0) target = $region29
    $region28: #{tpu_custom_call.1} parent=1 // pred_region
      _
    $region29: #{tpu_custom_call.1} parent=1 // pred_fallthru
      _
    // Predicated region
    $region30: #{tpu_custom_call.1} parent=1 // pred_check
      _
    $region31: #{tpu_custom_call.1} parent=1 // pred_check_branch
      %71 = sbr.rel (0) target = $region33
    $region32: #{tpu_custom_call.1} parent=1 // pred_region
      %72 = dma.done [#allocation4], 128
    $region33: #{tpu_custom_call.1} parent=1 // pred_fallthru
      _
    // Predicated region
    $region34: #{tpu_custom_call.1} parent=1 // pred_check
      _
    $region35: #{tpu_custom_call.1} parent=1 // pred_check_branch
      %74 = sbr.rel (0) target = $region37
    $region36: #{tpu_custom_call.1} parent=1 // pred_region
      %75 = dma.done [#allocation7], 3072
    $region37: #{tpu_custom_call.1} parent=1 // pred_fallthru
      _
    // Predicated region
    $region38: #{tpu_custom_call.1} parent=1 // pred_check
      _
    $region39: #{tpu_custom_call.1} parent=1 // pred_check_branch
      %77 = sbr.rel (0) target = $region41
    $region40: #{tpu_custom_call.1} parent=1 // pred_region
      %78 = dma.done [#allocation7], 3072
    $region41: #{tpu_custom_call.1} parent=1 // pred_fallthru
      _
    // Predicated region
    $region42: #{tpu_custom_call.1} parent=1 // pred_check
      _
    $region43: #{tpu_custom_call.1} parent=1 // pred_check_branch
      %80 = sbr.rel (0) target = $region45
    $region44: #{tpu_custom_call.1} parent=1 // pred_region
      %81 = dma.done [#allocation10], 3072
    $region45: #{tpu_custom_call.1} parent=1 // pred_fallthru
      _
    %p83 = scmp.eq.s32.totalorder 0, 0
    // Predicated region
    $region46: #{tpu_custom_call.1} parent=1 // pred_check
      %p84 = pneg %p83
    $region47: #{tpu_custom_call.1} parent=1 // pred_check_branch
      %86 = sbr.rel (%p84) target = $region49
    $region48: #{tpu_custom_call.1} parent=1 // pred_region
      %87 = vst [vmem:[#allocation2] sm:$0xff] 0.0
      %88 = vst [vmem:[#allocation2 + $0x8] sm:$0xff] 0.0
    $region49: #{tpu_custom_call.1} parent=1 // pred_fallthru
      _
    %v89 = vld [vmem:[#allocation3] sm:$0xf]
    %v90 = vld [vmem:[#allocation3 + $0x4] sm:$0xf]
    %v91 = vld [vmem:[#allocation6] sm:$0xff]
    %v92 = vld [vmem:[#allocation6 + $0x8] sm:$0xf]
    %v93 = vld [vmem:[#allocation6 + $0xc] sm:$0xff]
    %v94 = vld [vmem:[#allocation6 + $0x14] sm:$0xf]
    %v95 = vld [vmem:[#allocation6 + $0x18] sm:$0xff]
    %v96 = vld [vmem:[#allocation6 + $0x20] sm:$0xf]
    %v97 = vld [vmem:[#allocation6 + $0x24] sm:$0xff]
    %v98 = vld [vmem:[#allocation6 + $0x2c] sm:$0xf]
    %v99 = vld [vmem:[#allocation6 + $0x30] sm:$0xff]
    %v100 = vld [vmem:[#allocation6 + $0x38] sm:$0xf]
    %v101 = vld [vmem:[#allocation6 + $0x3c] sm:$0xff]
    %v102 = vld [vmem:[#allocation6 + $0x44] sm:$0xf]
    %v103 = vld [vmem:[#allocation6 + $0x48] sm:$0xff]
    %v104 = vld [vmem:[#allocation6 + $0x50] sm:$0xf]
    %v105 = vld [vmem:[#allocation6 + $0x54] sm:$0xff]
    %v106 = vld [vmem:[#allocation6 + $0x5c] sm:$0xf]
    %v107 = vld [vmem:[#allocation6 + $0x60] sm:$0xff]
    %v108 = vld [vmem:[#allocation6 + $0x68] sm:$0xf]
    %v109 = vld [vmem:[#allocation6 + $0x6c] sm:$0xff]
    %v110 = vld [vmem:[#allocation6 + $0x74] sm:$0xf]
    %v111 = vld [vmem:[#allocation6 + $0x78] sm:$0xff]
    %v112 = vld [vmem:[#allocation6 + $0x80] sm:$0xf]
    %v113 = vld [vmem:[#allocation6 + $0x84] sm:$0xff]
    %v114 = vld [vmem:[#allocation6 + $0x8c] sm:$0xf]
    %v115 = vld [vmem:[#allocation6 + $0x90] sm:$0xff]
    %v116 = vld [vmem:[#allocation6 + $0x98] sm:$0xf]
    %v117 = vld [vmem:[#allocation6 + $0x9c] sm:$0xff]
    %v118 = vld [vmem:[#allocation6 + $0xa4] sm:$0xf]
    %v119 = vld [vmem:[#allocation6 + $0xa8] sm:$0xff]
    %v120 = vld [vmem:[#allocation6 + $0xb0] sm:$0xf]
    %v121 = vld [vmem:[#allocation6 + $0xb4] sm:$0xff]
    %v122 = vld [vmem:[#allocation6 + $0xbc] sm:$0xf]
    %v123 = vld [vmem:[%s2] sm:$0x7]
    %v125 = vlaneseq
    %v126 = vshrl.u32 %v125, 7
    %v127 = vsub.s32 0, %v126
    %v128 = vrot.slane %v123, %v127
    %v129 = vlaneseq
    %v130 = vshrl.u32 %v129, 7
    %v131 = vsub.s32 1, %v130
    %v132 = vrot.slane %v123, %v131
    %v133 = vlaneseq
    %v134 = vshrl.u32 %v133, 7
    %v135 = vsub.s32 2, %v134
    %v136 = vrot.slane %v123, %v135
    %v142 = vunpack.c.l.b16 %v89
    %v143 = vunpack.c.l.b16 %v90
    %v144 = vpack.c.b16 %v143, %v142
    %v178 = vunpack.c.l.b16 %v91
    %v179 = vunpack.c.h.b16 %v91
    %v180 = vunpack.c.l.b16 %v92
    %v181 = vunpack.c.l.b16 %v93
    %v182 = vunpack.c.h.b16 %v93
    %v183 = vunpack.c.l.b16 %v94
    %v184 = vunpack.c.l.b16 %v95
    %v185 = vunpack.c.h.b16 %v95
    %v186 = vunpack.c.l.b16 %v96
    %v187 = vunpack.c.l.b16 %v97
    %v188 = vunpack.c.h.b16 %v97
    %v189 = vunpack.c.l.b16 %v98
    %v190 = vunpack.c.l.b16 %v99
    %v191 = vunpack.c.h.b16 %v99
    %v192 = vunpack.c.l.b16 %v100
    %v193 = vunpack.c.l.b16 %v101
    %v194 = vunpack.c.h.b16 %v101
    %v195 = vunpack.c.l.b16 %v102
    %v196 = vunpack.c.l.b16 %v103
    %v197 = vunpack.c.h.b16 %v103
    %v198 = vunpack.c.l.b16 %v104
    %v199 = vunpack.c.l.b16 %v105
    %v200 = vunpack.c.h.b16 %v105
    %v201 = vunpack.c.l.b16 %v106
    %v202 = vunpack.c.l.b16 %v107
    %v203 = vunpack.c.h.b16 %v107
    %v204 = vunpack.c.l.b16 %v108
    %v205 = vunpack.c.l.b16 %v109
    %v206 = vunpack.c.h.b16 %v109
    %v207 = vunpack.c.l.b16 %v110
    %v208 = vunpack.c.l.b16 %v111
    %v209 = vunpack.c.h.b16 %v111
    %v210 = vunpack.c.l.b16 %v112
    %v211 = vunpack.c.l.b16 %v113
    %v212 = vunpack.c.h.b16 %v113
    %v213 = vunpack.c.l.b16 %v114
    %v214 = vunpack.c.l.b16 %v115
    %v215 = vunpack.c.h.b16 %v115
    %v216 = vunpack.c.l.b16 %v116
    %v217 = vunpack.c.l.b16 %v117
    %v218 = vunpack.c.h.b16 %v117
    %v219 = vunpack.c.l.b16 %v118
    %v220 = vunpack.c.l.b16 %v119
    %v221 = vunpack.c.h.b16 %v119
    %v222 = vunpack.c.l.b16 %v120
    %v223 = vunpack.c.l.b16 %v121
    %v224 = vunpack.c.h.b16 %v121
    %v225 = vunpack.c.l.b16 %v122
    %v226 = vpack.c.b16 %v181, %v178
    %v227 = vpack.c.b16 %v182, %v179
    %v228 = vpack.c.b16 %v183, %v180
    %v229 = vpack.c.b16 %v187, %v184
    %v230 = vpack.c.b16 %v188, %v185
    %v231 = vpack.c.b16 %v189, %v186
    %v232 = vpack.c.b16 %v193, %v190
    %v233 = vpack.c.b16 %v194, %v191
    %v234 = vpack.c.b16 %v195, %v192
    %v235 = vpack.c.b16 %v199, %v196
    %v236 = vpack.c.b16 %v200, %v197
    %v237 = vpack.c.b16 %v201, %v198
    %v238 = vpack.c.b16 %v205, %v202
    %v239 = vpack.c.b16 %v206, %v203
    %v240 = vpack.c.b16 %v207, %v204
    %v241 = vpack.c.b16 %v211, %v208
    %v242 = vpack.c.b16 %v212, %v209
    %v243 = vpack.c.b16 %v213, %v210
    %v244 = vpack.c.b16 %v217, %v214
    %v245 = vpack.c.b16 %v218, %v215
    %v246 = vpack.c.b16 %v219, %v216
    %v247 = vpack.c.b16 %v223, %v220
    %v248 = vpack.c.b16 %v224, %v221
    %v249 = vpack.c.b16 %v225, %v222
    %274 = vmatprep.subr.bf16.mxu0 %v227
    %275 = vmatpush1.bf16.msra.mxu0 %v226
    %276 = vmatprep.subr.bf16.mxu0 %v230
    %277 = vmatpush1.bf16.msra.mxu0 %v229
    %278 = vmatprep.subr.bf16.mxu0 %v233
    %279 = vmatpush1.bf16.msra.mxu0 %v232
    %280 = vmatprep.subr.bf16.mxu0 %v236
    %281 = vmatpush1.bf16.msra.mxu0 %v235
    %282 = vmatprep.subr.bf16.mxu0 %v239
    %283 = vmatpush1.bf16.msra.mxu0 %v238
    %284 = vmatprep.subr.bf16.mxu0 %v242
    %285 = vmatpush1.bf16.msra.mxu0 %v241
    %286 = vmatprep.subr.bf16.mxu0 %v245
    %287 = vmatpush1.bf16.msra.mxu0 %v244
    %288 = vmatprep.subr.bf16.mxu0 %v248
    %289 = vmatpush1.bf16.msra.mxu0 %v247
    %290 = vmatprep.subr.bf16.mxu0 0
    %291 = vmatpush1.bf16.msra.mxu0 0
    %292 = vmatprep.subr.bf16.mxu0 0
    %293 = vmatpush1.bf16.msra.mxu0 0
    %294 = vmatprep.subr.bf16.mxu0 0
    %295 = vmatpush1.bf16.msra.mxu0 0
    %296 = vmatprep.subr.bf16.mxu0 0
    %297 = vmatpush1.bf16.msra.mxu0 0
    %298 = vmatprep.subr.bf16.mxu0 0
    %299 = vmatpush1.bf16.msra.mxu0 0
    %300 = vmatprep.subr.bf16.mxu0 0
    %301 = vmatpush1.bf16.msra.mxu0 0
    %302 = vmatprep.subr.bf16.mxu0 0
    %303 = vmatpush1.bf16.msra.mxu0 0
    %304 = vmatprep.subr.bf16.mxu0 0
    %305 = vmatpush1.bf16.msra.mxu0 0
    %306 = vmatprep.mubr.bf16.mxu0 0
    %307 = vmatmul.mubr.bf16.gmra.mrb[0].mxu0 %v144
    %v308 = vpop.f32.mrb[0].mxu0
    %v309 = vadd.f32 %v128, %v308
    %v310 = vpop.f32.mrb[0].mxu0
    %v311 = vadd.f32 %v132, %v310
    %v312 = vpop.f32.mrb[0].mxu0
    %v313 = vadd.f32 %v128, %v312
    %v314 = vpop.f32.mrb[0].mxu0
    %v315 = vadd.f32 %v132, %v314
    %316 = vdwg.mxu0
    %317 = vmatprep.subr.bf16.mxu0 0
    %318 = vmatpush1.bf16.msra.mxu0 %v228
    %319 = vmatprep.subr.bf16.mxu0 0
    %320 = vmatpush1.bf16.msra.mxu0 %v231
    %321 = vmatprep.subr.bf16.mxu0 0
    %322 = vmatpush1.bf16.msra.mxu0 %v234
    %323 = vmatprep.subr.bf16.mxu0 0
    %324 = vmatpush1.bf16.msra.mxu0 %v237
    %325 = vmatprep.subr.bf16.mxu0 0
    %326 = vmatpush1.bf16.msra.mxu0 %v240
    %327 = vmatprep.subr.bf16.mxu0 0
    %328 = vmatpush1.bf16.msra.mxu0 %v243
    %329 = vmatprep.subr.bf16.mxu0 0
    %330 = vmatpush1.bf16.msra.mxu0 %v246
    %331 = vmatprep.subr.bf16.mxu0 0
    %332 = vmatpush1.bf16.msra.mxu0 %v249
    %333 = vmatprep.subr.bf16.mxu0 0
    %334 = vmatpush1.bf16.msra.mxu0 0
    %335 = vmatprep.subr.bf16.mxu0 0
    %336 = vmatpush1.bf16.msra.mxu0 0
    %337 = vmatprep.subr.bf16.mxu0 0
    %338 = vmatpush1.bf16.msra.mxu0 0
    %339 = vmatprep.subr.bf16.mxu0 0
    %340 = vmatpush1.bf16.msra.mxu0 0
    %341 = vmatprep.subr.bf16.mxu0 0
    %342 = vmatpush1.bf16.msra.mxu0 0
    %343 = vmatprep.subr.bf16.mxu0 0
    %344 = vmatpush1.bf16.msra.mxu0 0
    %345 = vmatprep.subr.bf16.mxu0 0
    %346 = vmatpush1.bf16.msra.mxu0 0
    %347 = vmatprep.subr.bf16.mxu0 0
    %348 = vmatpush1.bf16.msra.mxu0 0
    %349 = vmatprep.mubr.bf16.mxu0 0
    %350 = vmatmul.mubr.bf16.gmra.mrb[0].mxu0 %v144
    %v351 = vpop.f32.mrb[0].mxu0
    %v352 = vadd.f32 %v136, %v351
    %v353 = vpop.f32.mrb[0].mxu0
    %v354 = vpop.f32.mrb[0].mxu0
    %v355 = vadd.f32 %v136, %v354
    %v356 = vpop.f32.mrb[0].mxu0
    %357 = vdwg.mxu0
    %v358 = vld [vmem:[#allocation8] sm:$0xff]
    %v359 = vld [vmem:[#allocation8 + $0x8] sm:$0xf]
    %v360 = vld [vmem:[#allocation8 + $0xc] sm:$0xff]
    %v361 = vld [vmem:[#allocation8 + $0x14] sm:$0xf]
    %v362 = vld [vmem:[#allocation8 + $0x18] sm:$0xff]
    %v363 = vld [vmem:[#allocation8 + $0x20] sm:$0xf]
    %v364 = vld [vmem:[#allocation8 + $0x24] sm:$0xff]
    %v365 = vld [vmem:[#allocation8 + $0x2c] sm:$0xf]
    %v366 = vld [vmem:[#allocation8 + $0x30] sm:$0xff]
    %v367 = vld [vmem:[#allocation8 + $0x38] sm:$0xf]
    %v368 = vld [vmem:[#allocation8 + $0x3c] sm:$0xff]
    %v369 = vld [vmem:[#allocation8 + $0x44] sm:$0xf]
    %v370 = vld [vmem:[#allocation8 + $0x48] sm:$0xff]
    %v371 = vld [vmem:[#allocation8 + $0x50] sm:$0xf]
    %v372 = vld [vmem:[#allocation8 + $0x54] sm:$0xff]
    %v373 = vld [vmem:[#allocation8 + $0x5c] sm:$0xf]
    %v374 = vld [vmem:[#allocation8 + $0x60] sm:$0xff]
    %v375 = vld [vmem:[#allocation8 + $0x68] sm:$0xf]
    %v376 = vld [vmem:[#allocation8 + $0x6c] sm:$0xff]
    %v377 = vld [vmem:[#allocation8 + $0x74] sm:$0xf]
    %v378 = vld [vmem:[#allocation8 + $0x78] sm:$0xff]
    %v379 = vld [vmem:[#allocation8 + $0x80] sm:$0xf]
    %v380 = vld [vmem:[#allocation8 + $0x84] sm:$0xff]
    %v381 = vld [vmem:[#allocation8 + $0x8c] sm:$0xf]
    %v382 = vld [vmem:[#allocation8 + $0x90] sm:$0xff]
    %v383 = vld [vmem:[#allocation8 + $0x98] sm:$0xf]
    %v384 = vld [vmem:[#allocation8 + $0x9c] sm:$0xff]
    %v385 = vld [vmem:[#allocation8 + $0xa4] sm:$0xf]
    %v386 = vld [vmem:[#allocation8 + $0xa8] sm:$0xff]
    %v387 = vld [vmem:[#allocation8 + $0xb0] sm:$0xf]
    %v388 = vld [vmem:[#allocation8 + $0xb4] sm:$0xff]
    %v389 = vld [vmem:[#allocation8 + $0xbc] sm:$0xf]
    %v390 = vld [vmem:[%s4] sm:$0x7]
    %v392 = vlaneseq
    %v393 = vshrl.u32 %v392, 7
    %v394 = vsub.s32 0, %v393
    %v395 = vrot.slane %v390, %v394
    %v396 = vlaneseq
    %v397 = vshrl.u32 %v396, 7
    %v398 = vsub.s32 1, %v397
    %v399 = vrot.slane %v390, %v398
    %v400 = vlaneseq
    %v401 = vshrl.u32 %v400, 7
    %v402 = vsub.s32 2, %v401
    %v403 = vrot.slane %v390, %v402
    %v439 = vunpack.c.l.b16 %v358
    %v440 = vunpack.c.h.b16 %v358
    %v441 = vunpack.c.l.b16 %v359
    %v442 = vunpack.c.l.b16 %v360
    %v443 = vunpack.c.h.b16 %v360
    %v444 = vunpack.c.l.b16 %v361
    %v445 = vunpack.c.l.b16 %v362
    %v446 = vunpack.c.h.b16 %v362
    %v447 = vunpack.c.l.b16 %v363
    %v448 = vunpack.c.l.b16 %v364
    %v449 = vunpack.c.h.b16 %v364
    %v450 = vunpack.c.l.b16 %v365
    %v451 = vunpack.c.l.b16 %v366
    %v452 = vunpack.c.h.b16 %v366
    %v453 = vunpack.c.l.b16 %v367
    %v454 = vunpack.c.l.b16 %v368
    %v455 = vunpack.c.h.b16 %v368
    %v456 = vunpack.c.l.b16 %v369
    %v457 = vunpack.c.l.b16 %v370
    %v458 = vunpack.c.h.b16 %v370
    %v459 = vunpack.c.l.b16 %v371
    %v460 = vunpack.c.l.b16 %v372
    %v461 = vunpack.c.h.b16 %v372
    %v462 = vunpack.c.l.b16 %v373
    %v463 = vunpack.c.l.b16 %v374
    %v464 = vunpack.c.h.b16 %v374
    %v465 = vunpack.c.l.b16 %v375
    %v466 = vunpack.c.l.b16 %v376
    %v467 = vunpack.c.h.b16 %v376
    %v468 = vunpack.c.l.b16 %v377
    %v469 = vunpack.c.l.b16 %v378
    %v470 = vunpack.c.h.b16 %v378
    %v471 = vunpack.c.l.b16 %v379
    %v472 = vunpack.c.l.b16 %v380
    %v473 = vunpack.c.h.b16 %v380
    %v474 = vunpack.c.l.b16 %v381
    %v475 = vunpack.c.l.b16 %v382
    %v476 = vunpack.c.h.b16 %v382
    %v477 = vunpack.c.l.b16 %v383
    %v478 = vunpack.c.l.b16 %v384
    %v479 = vunpack.c.h.b16 %v384
    %v480 = vunpack.c.l.b16 %v385
    %v481 = vunpack.c.l.b16 %v386
    %v482 = vunpack.c.h.b16 %v386
    %v483 = vunpack.c.l.b16 %v387
    %v484 = vunpack.c.l.b16 %v388
    %v485 = vunpack.c.h.b16 %v388
    %v486 = vunpack.c.l.b16 %v389
    %v487 = vpack.c.b16 %v442, %v439
    %v488 = vpack.c.b16 %v443, %v440
    %v489 = vpack.c.b16 %v444, %v441
    %v490 = vpack.c.b16 %v448, %v445
    %v491 = vpack.c.b16 %v449, %v446
    %v492 = vpack.c.b16 %v450, %v447
    %v493 = vpack.c.b16 %v454, %v451
    %v494 = vpack.c.b16 %v455, %v452
    %v495 = vpack.c.b16 %v456, %v453
    %v496 = vpack.c.b16 %v460, %v457
    %v497 = vpack.c.b16 %v461, %v458
    %v498 = vpack.c.b16 %v462, %v459
    %v499 = vpack.c.b16 %v466, %v463
    %v500 = vpack.c.b16 %v467, %v464
    %v501 = vpack.c.b16 %v468, %v465
    %v502 = vpack.c.b16 %v472, %v469
    %v503 = vpack.c.b16 %v473, %v470
    %v504 = vpack.c.b16 %v474, %v471
    %v505 = vpack.c.b16 %v478, %v475
    %v506 = vpack.c.b16 %v479, %v476
    %v507 = vpack.c.b16 %v480, %v477
    %v508 = vpack.c.b16 %v484, %v481
    %v509 = vpack.c.b16 %v485, %v482
    %v510 = vpack.c.b16 %v486, %v483
    %535 = vmatprep.subr.bf16.mxu0 %v488
    %536 = vmatpush1.bf16.msra.mxu0 %v487
    %537 = vmatprep.subr.bf16.mxu0 %v491
    %538 = vmatpush1.bf16.msra.mxu0 %v490
    %539 = vmatprep.subr.bf16.mxu0 %v494
    %540 = vmatpush1.bf16.msra.mxu0 %v493
    %541 = vmatprep.subr.bf16.mxu0 %v497
    %542 = vmatpush1.bf16.msra.mxu0 %v496
    %543 = vmatprep.subr.bf16.mxu0 %v500
    %544 = vmatpush1.bf16.msra.mxu0 %v499
    %545 = vmatprep.subr.bf16.mxu0 %v503
    %546 = vmatpush1.bf16.msra.mxu0 %v502
    %547 = vmatprep.subr.bf16.mxu0 %v506
    %548 = vmatpush1.bf16.msra.mxu0 %v505
    %549 = vmatprep.subr.bf16.mxu0 %v509
    %550 = vmatpush1.bf16.msra.mxu0 %v508
    %551 = vmatprep.subr.bf16.mxu0 0
    %552 = vmatpush1.bf16.msra.mxu0 0
    %553 = vmatprep.subr.bf16.mxu0 0
    %554 = vmatpush1.bf16.msra.mxu0 0
    %555 = vmatprep.subr.bf16.mxu0 0
    %556 = vmatpush1.bf16.msra.mxu0 0
    %557 = vmatprep.subr.bf16.mxu0 0
    %558 = vmatpush1.bf16.msra.mxu0 0
    %559 = vmatprep.subr.bf16.mxu0 0
    %560 = vmatpush1.bf16.msra.mxu0 0
    %561 = vmatprep.subr.bf16.mxu0 0
    %562 = vmatpush1.bf16.msra.mxu0 0
    %563 = vmatprep.subr.bf16.mxu0 0
    %564 = vmatpush1.bf16.msra.mxu0 0
    %565 = vmatprep.subr.bf16.mxu0 0
    %566 = vmatpush1.bf16.msra.mxu0 0
    %567 = vmatprep.mubr.bf16.mxu0 0
    %568 = vmatmul.mubr.bf16.gmra.mrb[0].mxu0 %v144
    %v569 = vpop.f32.mrb[0].mxu0
    %v570 = vadd.f32 %v395, %v569
    %v571 = vpop.f32.mrb[0].mxu0
    %v572 = vadd.f32 %v399, %v571
    %v573 = vpop.f32.mrb[0].mxu0
    %v574 = vadd.f32 %v395, %v573
    %v575 = vpop.f32.mrb[0].mxu0
    %v576 = vadd.f32 %v399, %v575
    %577 = vdwg.mxu0
    %578 = vmatprep.subr.bf16.mxu0 0
    %579 = vmatpush1.bf16.msra.mxu0 %v489
    %580 = vmatprep.subr.bf16.mxu0 0
    %581 = vmatpush1.bf16.msra.mxu0 %v492
    %582 = vmatprep.subr.bf16.mxu0 0
    %583 = vmatpush1.bf16.msra.mxu0 %v495
    %584 = vmatprep.subr.bf16.mxu0 0
    %585 = vmatpush1.bf16.msra.mxu0 %v498
    %586 = vmatprep.subr.bf16.mxu0 0
    %587 = vmatpush1.bf16.msra.mxu0 %v501
    %588 = vmatprep.subr.bf16.mxu0 0
    %589 = vmatpush1.bf16.msra.mxu0 %v504
    %590 = vmatprep.subr.bf16.mxu0 0
    %591 = vmatpush1.bf16.msra.mxu0 %v507
    %592 = vmatprep.subr.bf16.mxu0 0
    %593 = vmatpush1.bf16.msra.mxu0 %v510
    %594 = vmatprep.subr.bf16.mxu0 0
    %595 = vmatpush1.bf16.msra.mxu0 0
    %596 = vmatprep.subr.bf16.mxu0 0
    %597 = vmatpush1.bf16.msra.mxu0 0
    %598 = vmatprep.subr.bf16.mxu0 0
    %599 = vmatpush1.bf16.msra.mxu0 0
    %600 = vmatprep.subr.bf16.mxu0 0
    %601 = vmatpush1.bf16.msra.mxu0 0
    %602 = vmatprep.subr.bf16.mxu0 0
    %603 = vmatpush1.bf16.msra.mxu0 0
    %604 = vmatprep.subr.bf16.mxu0 0
    %605 = vmatpush1.bf16.msra.mxu0 0
    %606 = vmatprep.subr.bf16.mxu0 0
    %607 = vmatpush1.bf16.msra.mxu0 0
    %608 = vmatprep.subr.bf16.mxu0 0
    %609 = vmatpush1.bf16.msra.mxu0 0
    %610 = vmatprep.mubr.bf16.mxu0 0
    %611 = vmatmul.mubr.bf16.gmra.mrb[0].mxu0 %v144
    %v612 = vpop.f32.mrb[0].mxu0
    %v613 = vadd.f32 %v403, %v612
    %v614 = vpop.f32.mrb[0].mxu0
    %v615 = vpop.f32.mrb[0].mxu0
    %v616 = vadd.f32 %v403, %v615
    %v617 = vpop.f32.mrb[0].mxu0
    %618 = vdwg.mxu0
    %v619 = vxor.u32 %v309, 2147483648
    %v620 = vxor.u32 %v311, 2147483648
    %v621 = vxor.u32 %v352, 2147483648
    %v622 = vxor.u32 %v313, 2147483648
    %v623 = vxor.u32 %v315, 2147483648
    %v624 = vxor.u32 %v355, 2147483648
    %v625 = vmul.f32 %v619, 1.442695
    %v626 = vpow.pop %v625
    %v627 = vmul.f32 %v620, 1.442695
    %v628 = vpow.pop %v627
    %v629 = vmul.f32 %v621, 1.442695
    %v630 = vpow.pop %v629
    %v631 = vmul.f32 %v622, 1.442695
    %v632 = vpow.pop %v631
    %v633 = vmul.f32 %v623, 1.442695
    %v634 = vpow.pop %v633
    %v635 = vmul.f32 %v624, 1.442695
    %v636 = vpow.pop %v635
    %v637 = vadd.f32 %v626, 1.0
    %v638 = vadd.f32 %v628, 1.0
    %v639 = vadd.f32 %v630, 1.0
    %v640 = vadd.f32 %v632, 1.0
    %v641 = vadd.f32 %v634, 1.0
    %v642 = vadd.f32 %v636, 1.0
    %v643 = vrcp.pop %v637
    %v644 = vmul.f32 1.0, %v643
    %v645 = vrcp.pop %v638
    %v646 = vmul.f32 1.0, %v645
    %v647 = vrcp.pop %v639
    %v648 = vmul.f32 1.0, %v647
    %v649 = vrcp.pop %v640
    %v650 = vmul.f32 1.0, %v649
    %v651 = vrcp.pop %v641
    %v652 = vmul.f32 1.0, %v651
    %v653 = vrcp.pop %v642
    %v654 = vmul.f32 1.0, %v653
    %v655 = vmul.f32 %v309, %v644
    %v656 = vmul.f32 %v311, %v646
    %v657 = vmul.f32 %v352, %v648
    %v658 = vmul.f32 %v313, %v650
    %v659 = vmul.f32 %v315, %v652
    %v660 = vmul.f32 %v355, %v654
    %v661 = vmul.f32 %v655, %v570
    %v662 = vmul.f32 %v656, %v572
    %v663 = vmul.f32 %v657, %v613
    %v664 = vmul.f32 %v658, %v574
    %v665 = vmul.f32 %v659, %v576
    %v666 = vmul.f32 %v660, %v616
    %v667 = vld [vmem:[#allocation2] sm:$0xff]
    %v668 = vld [vmem:[#allocation2 + $0x8] sm:$0xff]
    %v669 = vpack.c.bf16 %v664, %v661
    %v670 = vpack.c.bf16 %v665, %v662
    %v671 = vpack.c.bf16 %v666, %v663
    %v672 = vld [vmem:[#allocation9] sm:$0xf]
    %v673 = vld [vmem:[#allocation9 + $0x4] sm:$0xf]
    %v674 = vld [vmem:[#allocation9 + $0x8] sm:$0xf]
    %v675 = vld [vmem:[#allocation9 + $0xc] sm:$0xf]
    %v676 = vld [vmem:[#allocation9 + $0x10] sm:$0xf]
    %v677 = vld [vmem:[#allocation9 + $0x14] sm:$0xf]
    %v678 = vld [vmem:[#allocation9 + $0x18] sm:$0xf]
    %v679 = vld [vmem:[#allocation9 + $0x1c] sm:$0xf]
    %v680 = vld [vmem:[#allocation9 + $0x20] sm:$0xf]
    %v681 = vld [vmem:[#allocation9 + $0x24] sm:$0xf]
    %v682 = vld [vmem:[#allocation9 + $0x28] sm:$0xf]
    %v683 = vld [vmem:[#allocation9 + $0x2c] sm:$0xf]
    %v684 = vld [vmem:[#allocation9 + $0x30] sm:$0xf]
    %v685 = vld [vmem:[#allocation9 + $0x34] sm:$0xf]
    %v686 = vld [vmem:[#allocation9 + $0x38] sm:$0xf]
    %v687 = vld [vmem:[#allocation9 + $0x3c] sm:$0xf]
    %v688 = vld [vmem:[#allocation9 + $0x40] sm:$0xf]
    %v689 = vld [vmem:[#allocation9 + $0x44] sm:$0xf]
    %v690 = vld [vmem:[#allocation9 + $0x48] sm:$0xf]
    %v691 = vld [vmem:[#allocation9 + $0x4c] sm:$0xf]
    %v692 = vld [vmem:[#allocation9 + $0x50] sm:$0xf]
    %v693 = vld [vmem:[#allocation9 + $0x54] sm:$0xf]
    %v694 = vld [vmem:[#allocation9 + $0x58] sm:$0xf]
    %v695 = vld [vmem:[#allocation9 + $0x5c] sm:$0xf]
    %v696 = vld [vmem:[#allocation9 + $0x60] sm:$0xf]
    %v697 = vld [vmem:[#allocation9 + $0x64] sm:$0xf]
    %v698 = vld [vmem:[#allocation9 + $0x68] sm:$0xf]
    %v699 = vld [vmem:[#allocation9 + $0x6c] sm:$0xf]
    %v700 = vld [vmem:[#allocation9 + $0x70] sm:$0xf]
    %v701 = vld [vmem:[#allocation9 + $0x74] sm:$0xf]
    %v702 = vld [vmem:[#allocation9 + $0x78] sm:$0xf]
    %v703 = vld [vmem:[#allocation9 + $0x7c] sm:$0xf]
    %v704 = vld [vmem:[#allocation9 + $0x80] sm:$0xf]
    %v705 = vld [vmem:[#allocation9 + $0x84] sm:$0xf]
    %v706 = vld [vmem:[#allocation9 + $0x88] sm:$0xf]
    %v707 = vld [vmem:[#allocation9 + $0x8c] sm:$0xf]
    %v708 = vld [vmem:[#allocation9 + $0x90] sm:$0xf]
    %v709 = vld [vmem:[#allocation9 + $0x94] sm:$0xf]
    %v710 = vld [vmem:[#allocation9 + $0x98] sm:$0xf]
    %v711 = vld [vmem:[#allocation9 + $0x9c] sm:$0xf]
    %v712 = vld [vmem:[#allocation9 + $0xa0] sm:$0xf]
    %v713 = vld [vmem:[#allocation9 + $0xa4] sm:$0xf]
    %v714 = vld [vmem:[#allocation9 + $0xa8] sm:$0xf]
    %v715 = vld [vmem:[#allocation9 + $0xac] sm:$0xf]
    %v716 = vld [vmem:[#allocation9 + $0xb0] sm:$0xf]
    %v717 = vld [vmem:[#allocation9 + $0xb4] sm:$0xf]
    %v718 = vld [vmem:[#allocation9 + $0xb8] sm:$0xf]
    %v719 = vld [vmem:[#allocation9 + $0xbc] sm:$0xf]
    %v768 = vunpack.c.l.b16 %v672
    %v769 = vunpack.c.l.b16 %v673
    %v770 = vunpack.c.l.b16 %v674
    %v771 = vunpack.c.l.b16 %v675
    %v772 = vunpack.c.l.b16 %v676
    %v773 = vunpack.c.l.b16 %v677
    %v774 = vunpack.c.l.b16 %v678
    %v775 = vunpack.c.l.b16 %v679
    %v776 = vunpack.c.l.b16 %v680
    %v777 = vunpack.c.l.b16 %v681
    %v778 = vunpack.c.l.b16 %v682
    %v779 = vunpack.c.l.b16 %v683
    %v780 = vunpack.c.l.b16 %v684
    %v781 = vunpack.c.l.b16 %v685
    %v782 = vunpack.c.l.b16 %v686
    %v783 = vunpack.c.l.b16 %v687
    %v784 = vunpack.c.l.b16 %v688
    %v785 = vunpack.c.l.b16 %v689
    %v786 = vunpack.c.l.b16 %v690
    %v787 = vunpack.c.l.b16 %v691
    %v788 = vunpack.c.l.b16 %v692
    %v789 = vunpack.c.l.b16 %v693
    %v790 = vunpack.c.l.b16 %v694
    %v791 = vunpack.c.l.b16 %v695
    %v792 = vunpack.c.l.b16 %v696
    %v793 = vunpack.c.l.b16 %v697
    %v794 = vunpack.c.l.b16 %v698
    %v795 = vunpack.c.l.b16 %v699
    %v796 = vunpack.c.l.b16 %v700
    %v797 = vunpack.c.l.b16 %v701
    %v798 = vunpack.c.l.b16 %v702
    %v799 = vunpack.c.l.b16 %v703
    %v800 = vunpack.c.l.b16 %v704
    %v801 = vunpack.c.l.b16 %v705
    %v802 = vunpack.c.l.b16 %v706
    %v803 = vunpack.c.l.b16 %v707
    %v804 = vunpack.c.l.b16 %v708
    %v805 = vunpack.c.l.b16 %v709
    %v806 = vunpack.c.l.b16 %v710
    %v807 = vunpack.c.l.b16 %v711
    %v808 = vunpack.c.l.b16 %v712
    %v809 = vunpack.c.l.b16 %v713
    %v810 = vunpack.c.l.b16 %v714
    %v811 = vunpack.c.l.b16 %v715
    %v812 = vunpack.c.l.b16 %v716
    %v813 = vunpack.c.l.b16 %v717
    %v814 = vunpack.c.l.b16 %v718
    %v815 = vunpack.c.l.b16 %v719
    %v816 = vpack.c.b16 %v769, %v768
    %v817 = vpack.c.b16 %v771, %v770
    %v818 = vpack.c.b16 %v773, %v772
    %v819 = vpack.c.b16 %v775, %v774
    %v820 = vpack.c.b16 %v777, %v776
    %v821 = vpack.c.b16 %v779, %v778
    %v822 = vpack.c.b16 %v781, %v780
    %v823 = vpack.c.b16 %v783, %v782
    %v824 = vpack.c.b16 %v785, %v784
    %v825 = vpack.c.b16 %v787, %v786
    %v826 = vpack.c.b16 %v789, %v788
    %v827 = vpack.c.b16 %v791, %v790
    %v828 = vpack.c.b16 %v793, %v792
    %v829 = vpack.c.b16 %v795, %v794
    %v830 = vpack.c.b16 %v797, %v796
    %v831 = vpack.c.b16 %v799, %v798
    %v832 = vpack.c.b16 %v801, %v800
    %v833 = vpack.c.b16 %v803, %v802
    %v834 = vpack.c.b16 %v805, %v804
    %v835 = vpack.c.b16 %v807, %v806
    %v836 = vpack.c.b16 %v809, %v808
    %v837 = vpack.c.b16 %v811, %v810
    %v838 = vpack.c.b16 %v813, %v812
    %v839 = vpack.c.b16 %v815, %v814
    %864 = vmatprep.subr.bf16.mxu0 0
    %865 = vmatpush1.bf16.msra.mxu0 %v816
    %866 = vmatprep.subr.bf16.mxu0 0
    %867 = vmatpush1.bf16.msra.mxu0 %v817
    %868 = vmatprep.subr.bf16.mxu0 0
    %869 = vmatpush1.bf16.msra.mxu0 %v818
    %870 = vmatprep.subr.bf16.mxu0 0
    %871 = vmatpush1.bf16.msra.mxu0 %v819
    %872 = vmatprep.subr.bf16.mxu0 0
    %873 = vmatpush1.bf16.msra.mxu0 %v820
    %874 = vmatprep.subr.bf16.mxu0 0
    %875 = vmatpush1.bf16.msra.mxu0 %v821
    %876 = vmatprep.subr.bf16.mxu0 0
    %877 = vmatpush1.bf16.msra.mxu0 %v822
    %878 = vmatprep.subr.bf16.mxu0 0
    %879 = vmatpush1.bf16.msra.mxu0 %v823
    %880 = vmatprep.subr.bf16.mxu0 0
    %881 = vmatpush1.bf16.msra.mxu0 %v824
    %882 = vmatprep.subr.bf16.mxu0 0
    %883 = vmatpush1.bf16.msra.mxu0 %v825
    %884 = vmatprep.subr.bf16.mxu0 0
    %885 = vmatpush1.bf16.msra.mxu0 %v826
    %886 = vmatprep.subr.bf16.mxu0 0
    %887 = vmatpush1.bf16.msra.mxu0 %v827
    %888 = vmatprep.subr.bf16.mxu0 0
    %889 = vmatpush1.bf16.msra.mxu0 %v828
    %890 = vmatprep.subr.bf16.mxu0 0
    %891 = vmatpush1.bf16.msra.mxu0 %v829
    %892 = vmatprep.subr.bf16.mxu0 0
    %893 = vmatpush1.bf16.msra.mxu0 %v830
    %894 = vmatprep.subr.bf16.mxu0 0
    %895 = vmatpush1.bf16.msra.mxu0 %v831
    %896 = vmatprep.mubr.bf16.mxu0 %v670
    %897 = vmatmul.mubr.bf16.gmra.mrb[0].mxu0 %v669
    %v898 = vpop.f32.mrb[0].mxu0
    %v899 = vadd.f32 0.0, %v898
    %v900 = vpop.f32.mrb[0].mxu0
    %v901 = vpop.f32.mrb[0].mxu0
    %v902 = vadd.f32 0.0, %v901
    %v903 = vpop.f32.mrb[0].mxu0
    %904 = vdwg.mxu0
    %905 = vmatprep.subr.bf16.mxu0 0
    %906 = vmatpush1.bf16.msra.mxu0 %v832
    %907 = vmatprep.subr.bf16.mxu0 0
    %908 = vmatpush1.bf16.msra.mxu0 %v833
    %909 = vmatprep.subr.bf16.mxu0 0
    %910 = vmatpush1.bf16.msra.mxu0 %v834
    %911 = vmatprep.subr.bf16.mxu0 0
    %912 = vmatpush1.bf16.msra.mxu0 %v835
    %913 = vmatprep.subr.bf16.mxu0 0
    %914 = vmatpush1.bf16.msra.mxu0 %v836
    %915 = vmatprep.subr.bf16.mxu0 0
    %916 = vmatpush1.bf16.msra.mxu0 %v837
    %917 = vmatprep.subr.bf16.mxu0 0
    %918 = vmatpush1.bf16.msra.mxu0 %v838
    %919 = vmatprep.subr.bf16.mxu0 0
    %920 = vmatpush1.bf16.msra.mxu0 %v839
    %921 = vmatprep.subr.bf16.mxu0 0
    %922 = vmatpush1.bf16.msra.mxu0 0
    %923 = vmatprep.subr.bf16.mxu0 0
    %924 = vmatpush1.bf16.msra.mxu0 0
    %925 = vmatprep.subr.bf16.mxu0 0
    %926 = vmatpush1.bf16.msra.mxu0 0
    %927 = vmatprep.subr.bf16.mxu0 0
    %928 = vmatpush1.bf16.msra.mxu0 0
    %929 = vmatprep.subr.bf16.mxu0 0
    %930 = vmatpush1.bf16.msra.mxu0 0
    %931 = vmatprep.subr.bf16.mxu0 0
    %932 = vmatpush1.bf16.msra.mxu0 0
    %933 = vmatprep.subr.bf16.mxu0 0
    %934 = vmatpush1.bf16.msra.mxu0 0
    %935 = vmatprep.subr.bf16.mxu0 0
    %936 = vmatpush1.bf16.msra.mxu0 0
    %937 = vmatprep.mubr.bf16.mxu0 0
    %938 = vmatmul.mubr.bf16.gmra.mrb[0].mxu0 %v671
    %v939 = vpop.f32.mrb[0].mxu0
    %v940 = vadd.f32 %v899, %v939
    %v941 = vpop.f32.mrb[0].mxu0
    %v942 = vpop.f32.mrb[0].mxu0
    %v943 = vadd.f32 %v902, %v942
    %v944 = vpop.f32.mrb[0].mxu0
    %945 = vdwg.mxu0
    %v946 = vadd.f32 %v667, %v940
    %v947 = vadd.f32 %v668, %v943
    %948 = vst [vmem:[#allocation2] sm:$0xff] %v946
    %949 = vst [vmem:[#allocation2 + $0x8] sm:$0xff] %v947
    // Predicated region
    $region50: #{tpu_custom_call.1} parent=1 // pred_check
      %p950 = pneg %p83
    $region51: #{tpu_custom_call.1} parent=1 // pred_check_branch
      %952 = sbr.rel (%p950) target = $region53
    $region52: #{tpu_custom_call.1} parent=1 // pred_region
      %v953 = vld [vmem:[#allocation2] sm:$0xff]
      %v954 = vld [vmem:[#allocation2 + $0x8] sm:$0xff]
      %v955 = vld [vmem:[%s6] sm:$0x1]
      %v957 = vlaneseq
      %v958 = vshrl.u32 %v957, 7
      %v959 = vsub.s32 0, %v958
      %v960 = vrot.slane %v955, %v959
      %v962 = vadd.f32 %v953, %v960
      %v963 = vadd.f32 %v954, %v960
      %964 = vst [vmem:[#allocation11] sm:$0xff] %v962
      %965 = vst [vmem:[#allocation11 + $0x8] sm:$0xff] %v963
    $region53: #{tpu_custom_call.1} parent=1 // pred_fallthru
      _
    // Predicated region
    $region54: #{tpu_custom_call.1} parent=1 // pred_check
      _
    $region55: #{tpu_custom_call.1} parent=1 // pred_check_branch
      %967 = sbr.rel (0) target = $region57
    $region56: #{tpu_custom_call.1} parent=1 // pred_region
      %s969 = ssub.s32 256, 256
      %970 = vsyncadd [#allocation5], %s969
      %s971 = sshll.u32 [#allocation11], 4
      %s972 = int_to_ptr.vmem [resolvable:$true] %s971
      %977 = dma.vmem_to_hbm [thread:$0]  %s972, 256, %s7, [#allocation5], 128, 128, 8
    $region57: #{tpu_custom_call.1} parent=1 // pred_fallthru
      _
    // Predicated region
    $region58: #{tpu_custom_call.1} parent=1 // pred_check
      _
    $region59: #{tpu_custom_call.1} parent=1 // pred_check_branch
      %979 = sbr.rel (0) target = $region61
    $region60: #{tpu_custom_call.1} parent=1 // pred_region
      %980 = dma.done [#allocation5], 256
    $region61: #{tpu_custom_call.1} parent=1 // pred_fallthru
      _
    %981 = vsyncpa [#allocation4], 1
    %982 = vsyncpa [#allocation7], 1
    %983 = vsyncpa [#allocation10], 1
    %984 = vsyncpa [#allocation5], 1

// kernel: tpu_custom_call.1
$region0: #{tpu_custom_call.1}
  #allocation0 [shape = 'u32[]', space=smem, size = 0x4, offset = 0x4, fixed_abs, tag = 'smem constant byte address 0x4 - core index']
  #allocation1 [shape = 'u32[144,128]{1,0:T(1,128)}', space=vmem, size = 0x12000, scoped, tag = 'internal scratch']
  #allocation2 [shape = 'f32[16,128]{1,0:T(8,128)}', space=vmem, size = 0x2000, scoped, tag = 'scratch operand']
  %s0 = inlined_call_operand.hbm [shape: bf16[16,128], index: 0, kind: input, shape index: {}]
  %s1 = inlined_call_operand.hbm [shape: bf16[128,384], index: 1, kind: input, shape index: {}]
  %s2 = inlined_call_operand.vmem [shape: f32[1,384], index: 2, kind: input, shape index: {}]
  %s3 = inlined_call_operand.hbm [shape: bf16[128,384], index: 3, kind: input, shape index: {}]
  %s4 = inlined_call_operand.vmem [shape: f32[1,384], index: 4, kind: input, shape index: {}]
  %s5 = inlined_call_operand.hbm [shape: bf16[384,128], index: 5, kind: input, shape index: {}]
  %s6 = inlined_call_operand.vmem [shape: f32[1,128], index: 6, kind: input, shape index: {}]
  %s7 = inlined_call_operand.hbm [shape: f32[16,128], index: 7, kind: output, shape index: {}]
  %s8 = sld [smem:[#allocation0]]
  $region62: #{tpu_custom_call.1} parent=0
    _
  %s10 = ssub.s32 1, %s8
  %s11 = scalar_select 0, %s10, %s8
  $region1: #{tpu_custom_call.1} parent=0
    #allocation3 [shape = 'u8[4096]{0}', space=vmem, size = 0x1000, scoped, tag = 'input window, operand 0, single buffered']
    #allocation4 [shape = 's32[1]{0}', space=sflag, size = 0x4, scoped, tag = 'scoped memory for tpu_custom_call.1']
    #allocation5 [shape = 's32[1]{0}', space=sflag, size = 0x4, scoped, tag = 'scoped memory for tpu_custom_call.1']
    #allocation6 [shape = 'u8[98304]{0}', space=vmem, size = 0x18000, scoped, tag = 'input window, operand 1, single buffered']
    #allocation7 [shape = 's32[1]{0}', space=sflag, size = 0x4, scoped, tag = 'scoped memory for tpu_custom_call.1']
    #allocation8 [shape = 'u8[98304]{0}', space=vmem, size = 0x18000, scoped, tag = 'input window, operand 3, single buffered']
    #allocation9 [shape = 'u8[98304]{0}', space=vmem, size = 0x18000, scoped, tag = 'input window, operand 5, single buffered']
    #allocation10 [shape = 's32[1]{0}', space=sflag, size = 0x4, scoped, tag = 'scoped memory for tpu_custom_call.1']
    #allocation11 [shape = 'u8[8192]{0}', space=vmem, size = 0x2000, scoped, tag = 'output window, operand 0, single buffered']
    %12 = vsyncpa [#allocation4], 0
    %13 = vsyncpa [#allocation7], 0
    %14 = vsyncpa [#allocation10], 0
    %15 = vsyncpa [#allocation5], 0
    // Predicated region
    $region2: #{tpu_custom_call.1} parent=1 // pred_check
      _
    $region3: #{tpu_custom_call.1} parent=1 // pred_check_branch
      %17 = sbr.rel (0) target = $region5
    $region4: #{tpu_custom_call.1} parent=1 // pred_region
      %s19 = ssub.s32 128, 128
      %20 = vsyncadd [#allocation4], %s19
      %s21 = sshll.u32 [#allocation3], 4
      %s22 = int_to_ptr.vmem [resolvable:$true] %s21
      %27 = dma.hbm_to_vmem [thread:$0]  %s0, 128, %s22, [#allocation4], 64, 64, 4
    $region5: #{tpu_custom_call.1} parent=1 // pred_fallthru
      _
    // Predicated region
    $region6: #{tpu_custom_call.1} parent=1 // pred_check
      _
    $region7: #{tpu_custom_call.1} parent=1 // pred_check_branch
      %29 = sbr.rel (0) target = $region9
    $region8: #{tpu_custom_call.1} parent=1 // pred_region
      %s31 = ssub.s32 3072, 3072
      %32 = vsyncadd [#allocation7], %s31
      %s33 = sshll.u32 [#allocation6], 4
      %s34 = int_to_ptr.vmem [resolvable:$true] %s33
      %39 = dma.hbm_to_vmem [thread:$0]  %s1, 3072, %s34, [#allocation7], 192, 192, 12
    $region9: #{tpu_custom_call.1} parent=1 // pred_fallthru
      _
    // Predicated region
    $region10: #{tpu_custom_call.1} parent=1 // pred_check
      _
    $region11: #{tpu_custom_call.1} parent=1 // pred_check_branch
      %41 = sbr.rel (0) target = $region13
    $region12: #{tpu_custom_call.1} parent=1 // pred_region
      _
    $region13: #{tpu_custom_call.1} parent=1 // pred_fallthru
      _
    // Predicated region
    $region14: #{tpu_custom_call.1} parent=1 // pred_check
      _
    $region15: #{tpu_custom_call.1} parent=1 // pred_check_branch
      %43 = sbr.rel (0) target = $region17
    $region16: #{tpu_custom_call.1} parent=1 // pred_region
      %s45 = ssub.s32 3072, 3072
      %46 = vsyncadd [#allocation7], %s45
      %s47 = sshll.u32 [#allocation8], 4
      %s48 = int_to_ptr.vmem [resolvable:$true] %s47
      %53 = dma.hbm_to_vmem [thread:$0]  %s3, 3072, %s48, [#allocation7], 192, 192, 12
    $region17: #{tpu_custom_call.1} parent=1 // pred_fallthru
      _
    // Predicated region
    $region18: #{tpu_custom_call.1} parent=1 // pred_check
      _
    $region19: #{tpu_custom_call.1} parent=1 // pred_check_branch
      %55 = sbr.rel (0) target = $region21
    $region20: #{tpu_custom_call.1} parent=1 // pred_region
      _
    $region21: #{tpu_custom_call.1} parent=1 // pred_fallthru
      _
    // Predicated region
    $region22: #{tpu_custom_call.1} parent=1 // pred_check
      _
    $region23: #{tpu_custom_call.1} parent=1 // pred_check_branch
      %57 = sbr.rel (0) target = $region25
    $region24: #{tpu_custom_call.1} parent=1 // pred_region
      %s59 = ssub.s32 3072, 3072
      %60 = vsyncadd [#allocation10], %s59
      %s61 = sshll.u32 [#allocation9], 4
      %s62 = int_to_ptr.vmem [resolvable:$true] %s61
      %67 = dma.hbm_to_vmem [thread:$0]  %s5, 3072, %s62, [#allocation10], 64, 64, 4
    $region25: #{tpu_custom_call.1} parent=1 // pred_fallthru
      _
    // Predicated region
    $region26: #{tpu_custom_call.1} parent=1 // pred_check
      _
    $region27: #{tpu_custom_call.1} parent=1 // pred_check_branch
      %69 = sbr.rel (0) target = $region29
    $region28: #{tpu_custom_call.1} parent=1 // pred_region
      _
    $region29: #{tpu_custom_call.1} parent=1 // pred_fallthru
      _
    // Predicated region
    $region30: #{tpu_custom_call.1} parent=1 // pred_check
      _
    $region31: #{tpu_custom_call.1} parent=1 // pred_check_branch
      %71 = sbr.rel (0) target = $region33
    $region32: #{tpu_custom_call.1} parent=1 // pred_region
      %72 = dma.done [#allocation4], 128
    $region33: #{tpu_custom_call.1} parent=1 // pred_fallthru
      _
    // Predicated region
    $region34: #{tpu_custom_call.1} parent=1 // pred_check
      _
    $region35: #{tpu_custom_call.1} parent=1 // pred_check_branch
      %74 = sbr.rel (0) target = $region37
    $region36: #{tpu_custom_call.1} parent=1 // pred_region
      %75 = dma.done [#allocation7], 3072
    $region37: #{tpu_custom_call.1} parent=1 // pred_fallthru
      _
    // Predicated region
    $region38: #{tpu_custom_call.1} parent=1 // pred_check
      _
    $region39: #{tpu_custom_call.1} parent=1 // pred_check_branch
      %77 = sbr.rel (0) target = $region41
    $region40: #{tpu_custom_call.1} parent=1 // pred_region
      %78 = dma.done [#allocation7], 3072
    $region41: #{tpu_custom_call.1} parent=1 // pred_fallthru
      _
    // Predicated region
    $region42: #{tpu_custom_call.1} parent=1 // pred_check
      _
    $region43: #{tpu_custom_call.1} parent=1 // pred_check_branch
      %80 = sbr.rel (0) target = $region45
    $region44: #{tpu_custom_call.1} parent=1 // pred_region
      %81 = dma.done [#allocation10], 3072
    $region45: #{tpu_custom_call.1} parent=1 // pred_fallthru
      _
    %p83 = scmp.eq.s32.totalorder 0, 0
    // Predicated region
    $region46: #{tpu_custom_call.1} parent=1 // pred_check
      %p84 = pneg %p83
    $region47: #{tpu_custom_call.1} parent=1 // pred_check_branch
      %86 = sbr.rel (%p84) target = $region49
    $region48: #{tpu_custom_call.1} parent=1 // pred_region
      %87 = vst [vmem:[#allocation2] sm:$0xff] 0.0
      %88 = vst [vmem:[#allocation2 + $0x8] sm:$0xff] 0.0
    $region49: #{tpu_custom_call.1} parent=1 // pred_fallthru
      _
    %v89 = vld [vmem:[#allocation3] sm:$0xf]
    %v90 = vld [vmem:[#allocation3 + $0x4] sm:$0xf]
    %v91 = vld [vmem:[#allocation6] sm:$0xff]
    %v92 = vld [vmem:[#allocation6 + $0x8] sm:$0xf]
    %v93 = vld [vmem:[#allocation6 + $0xc] sm:$0xff]
    %v94 = vld [vmem:[#allocation6 + $0x14] sm:$0xf]
    %v95 = vld [vmem:[#allocation6 + $0x18] sm:$0xff]
    %v96 = vld [vmem:[#allocation6 + $0x20] sm:$0xf]
    %v97 = vld [vmem:[#allocation6 + $0x24] sm:$0xff]
    %v98 = vld [vmem:[#allocation6 + $0x2c] sm:$0xf]
    %v99 = vld [vmem:[#allocation6 + $0x30] sm:$0xff]
    %v100 = vld [vmem:[#allocation6 + $0x38] sm:$0xf]
    %v101 = vld [vmem:[#allocation6 + $0x3c] sm:$0xff]
    %v102 = vld [vmem:[#allocation6 + $0x44] sm:$0xf]
    %v103 = vld [vmem:[#allocation6 + $0x48] sm:$0xff]
    %v104 = vld [vmem:[#allocation6 + $0x50] sm:$0xf]
    %v105 = vld [vmem:[#allocation6 + $0x54] sm:$0xff]
    %v106 = vld [vmem:[#allocation6 + $0x5c] sm:$0xf]
    %v107 = vld [vmem:[#allocation6 + $0x60] sm:$0xff]
    %v108 = vld [vmem:[#allocation6 + $0x68] sm:$0xf]
    %v109 = vld [vmem:[#allocation6 + $0x6c] sm:$0xff]
    %v110 = vld [vmem:[#allocation6 + $0x74] sm:$0xf]
    %v111 = vld [vmem:[#allocation6 + $0x78] sm:$0xff]
    %v112 = vld [vmem:[#allocation6 + $0x80] sm:$0xf]
    %v113 = vld [vmem:[#allocation6 + $0x84] sm:$0xff]
    %v114 = vld [vmem:[#allocation6 + $0x8c] sm:$0xf]
    %v115 = vld [vmem:[#allocation6 + $0x90] sm:$0xff]
    %v116 = vld [vmem:[#allocation6 + $0x98] sm:$0xf]
    %v117 = vld [vmem:[#allocation6 + $0x9c] sm:$0xff]
    %v118 = vld [vmem:[#allocation6 + $0xa4] sm:$0xf]
    %v119 = vld [vmem:[#allocation6 + $0xa8] sm:$0xff]
    %v120 = vld [vmem:[#allocation6 + $0xb0] sm:$0xf]
    %v121 = vld [vmem:[#allocation6 + $0xb4] sm:$0xff]
    %v122 = vld [vmem:[#allocation6 + $0xbc] sm:$0xf]
    %v123 = vld [vmem:[%s2] sm:$0x7]
    %v125 = vlaneseq
    %v126 = vshrl.u32 %v125, 7
    %v127 = vsub.s32 0, %v126
    %v128 = vrot.slane %v123, %v127
    %v129 = vlaneseq
    %v130 = vshrl.u32 %v129, 7
    %v131 = vsub.s32 1, %v130
    %v132 = vrot.slane %v123, %v131
    %v133 = vlaneseq
    %v134 = vshrl.u32 %v133, 7
    %v135 = vsub.s32 2, %v134
    %v136 = vrot.slane %v123, %v135
    %v142 = vunpack.c.l.b16 %v89
    %v143 = vunpack.c.l.b16 %v90
    %v144 = vpack.c.b16 %v143, %v142
    %v178 = vunpack.c.l.b16 %v91
    %v179 = vunpack.c.h.b16 %v91
    %v180 = vunpack.c.l.b16 %v92
    %v181 = vunpack.c.l.b16 %v93
    %v182 = vunpack.c.h.b16 %v93
    %v183 = vunpack.c.l.b16 %v94
    %v184 = vunpack.c.l.b16 %v95
    %v185 = vunpack.c.h.b16 %v95
    %v186 = vunpack.c.l.b16 %v96
    %v187 = vunpack.c.l.b16 %v97
    %v188 = vunpack.c.h.b16 %v97
    %v189 = vunpack.c.l.b16 %v98
    %v190 = vunpack.c.l.b16 %v99
    %v191 = vunpack.c.h.b16 %v99
    %v192 = vunpack.c.l.b16 %v100
    %v193 = vunpack.c.l.b16 %v101
    %v194 = vunpack.c.h.b16 %v101
    %v195 = vunpack.c.l.b16 %v102
    %v196 = vunpack.c.l.b16 %v103
    %v197 = vunpack.c.h.b16 %v103
    %v198 = vunpack.c.l.b16 %v104
    %v199 = vunpack.c.l.b16 %v105
    %v200 = vunpack.c.h.b16 %v105
    %v201 = vunpack.c.l.b16 %v106
    %v202 = vunpack.c.l.b16 %v107
    %v203 = vunpack.c.h.b16 %v107
    %v204 = vunpack.c.l.b16 %v108
    %v205 = vunpack.c.l.b16 %v109
    %v206 = vunpack.c.h.b16 %v109
    %v207 = vunpack.c.l.b16 %v110
    %v208 = vunpack.c.l.b16 %v111
    %v209 = vunpack.c.h.b16 %v111
    %v210 = vunpack.c.l.b16 %v112
    %v211 = vunpack.c.l.b16 %v113
    %v212 = vunpack.c.h.b16 %v113
    %v213 = vunpack.c.l.b16 %v114
    %v214 = vunpack.c.l.b16 %v115
    %v215 = vunpack.c.h.b16 %v115
    %v216 = vunpack.c.l.b16 %v116
    %v217 = vunpack.c.l.b16 %v117
    %v218 = vunpack.c.h.b16 %v117
    %v219 = vunpack.c.l.b16 %v118
    %v220 = vunpack.c.l.b16 %v119
    %v221 = vunpack.c.h.b16 %v119
    %v222 = vunpack.c.l.b16 %v120
    %v223 = vunpack.c.l.b16 %v121
    %v224 = vunpack.c.h.b16 %v121
    %v225 = vunpack.c.l.b16 %v122
    %v226 = vpack.c.b16 %v181, %v178
    %v227 = vpack.c.b16 %v182, %v179
    %v228 = vpack.c.b16 %v183, %v180
    %v229 = vpack.c.b16 %v187, %v184
    %v230 = vpack.c.b16 %v188, %v185
    %v231 = vpack.c.b16 %v189, %v186
    %v232 = vpack.c.b16 %v193, %v190
    %v233 = vpack.c.b16 %v194, %v191
    %v234 = vpack.c.b16 %v195, %v192
    %v235 = vpack.c.b16 %v199, %v196
    %v236 = vpack.c.b16 %v200, %v197
    %v237 = vpack.c.b16 %v201, %v198
    %v238 = vpack.c.b16 %v205, %v202
    %v239 = vpack.c.b16 %v206, %v203
    %v240 = vpack.c.b16 %v207, %v204
    %v241 = vpack.c.b16 %v211, %v208
    %v242 = vpack.c.b16 %v212, %v209
    %v243 = vpack.c.b16 %v213, %v210
    %v244 = vpack.c.b16 %v217, %v214
    %v245 = vpack.c.b16 %v218, %v215
    %v246 = vpack.c.b16 %v219, %v216
    %v247 = vpack.c.b16 %v223, %v220
    %v248 = vpack.c.b16 %v224, %v221
    %v249 = vpack.c.b16 %v225, %v222
    %274 = vmatprep.subr.bf16.mxu0 %v227
    %275 = vmatpush1.bf16.msra.mxu0 %v226
    %276 = vmatprep.subr.bf16.mxu0 %v230
    %277 = vmatpush1.bf16.msra.mxu0 %v229
    %278 = vmatprep.subr.bf16.mxu0 %v233
    %279 = vmatpush1.bf16.msra.mxu0 %v232
    %280 = vmatprep.subr.bf16.mxu0 %v236
    %281 = vmatpush1.bf16.msra.mxu0 %v235
    %282 = vmatprep.subr.bf16.mxu0 %v239
    %283 = vmatpush1.bf16.msra.mxu0 %v238
    %284 = vmatprep.subr.bf16.mxu0 %v242
    %285 = vmatpush1.bf16.msra.mxu0 %v241
    %286 = vmatprep.subr.bf16.mxu0 %v245
    %287 = vmatpush1.bf16.msra.mxu0 %v244
    %288 = vmatprep.subr.bf16.mxu0 %v248
    %289 = vmatpush1.bf16.msra.mxu0 %v247
    %290 = vmatprep.subr.bf16.mxu0 0
    %291 = vmatpush1.bf16.msra.mxu0 0
    %292 = vmatprep.subr.bf16.mxu0 0
    %293 = vmatpush1.bf16.msra.mxu0 0
    %294 = vmatprep.subr.bf16.mxu0 0
    %295 = vmatpush1.bf16.msra.mxu0 0
    %296 = vmatprep.subr.bf16.mxu0 0
    %297 = vmatpush1.bf16.msra.mxu0 0
    %298 = vmatprep.subr.bf16.mxu0 0
    %299 = vmatpush1.bf16.msra.mxu0 0
    %300 = vmatprep.subr.bf16.mxu0 0
    %301 = vmatpush1.bf16.msra.mxu0 0
    %302 = vmatprep.subr.bf16.mxu0 0
    %303 = vmatpush1.bf16.msra.mxu0 0
    %304 = vmatprep.subr.bf16.mxu0 0
    %305 = vmatpush1.bf16.msra.mxu0 0
    %306 = vmatprep.mubr.bf16.mxu0 0
    %307 = vmatmul.mubr.bf16.gmra.mrb[0].mxu0 %v144
    %v308 = vpop.f32.mrb[0].mxu0
    %v309 = vadd.f32 %v128, %v308
    %v310 = vpop.f32.mrb[0].mxu0
    %v311 = vadd.f32 %v132, %v310
    %v312 = vpop.f32.mrb[0].mxu0
    %v313 = vadd.f32 %v128, %v312
    %v314 = vpop.f32.mrb[0].mxu0
    %v315 = vadd.f32 %v132, %v314
    %316 = vdwg.mxu0
    %317 = vmatprep.subr.bf16.mxu0 0
    %318 = vmatpush1.bf16.msra.mxu0 %v228
    %319 = vmatprep.subr.bf16.mxu0 0
    %320 = vmatpush1.bf16.msra.mxu0 %v231
    %321 = vmatprep.subr.bf16.mxu0 0
    %322 = vmatpush1.bf16.msra.mxu0 %v234
    %323 = vmatprep.subr.bf16.mxu0 0
    %324 = vmatpush1.bf16.msra.mxu0 %v237
    %325 = vmatprep.subr.bf16.mxu0 0
    %326 = vmatpush1.bf16.msra.mxu0 %v240
    %327 = vmatprep.subr.bf16.mxu0 0
    %328 = vmatpush1.bf16.msra.mxu0 %v243
    %329 = vmatprep.subr.bf16.mxu0 0
    %330 = vmatpush1.bf16.msra.mxu0 %v246
    %331 = vmatprep.subr.bf16.mxu0 0
    %332 = vmatpush1.bf16.msra.mxu0 %v249
    %333 = vmatprep.subr.bf16.mxu0 0
    %334 = vmatpush1.bf16.msra.mxu0 0
    %335 = vmatprep.subr.bf16.mxu0 0
    %336 = vmatpush1.bf16.msra.mxu0 0
    %337 = vmatprep.subr.bf16.mxu0 0
    %338 = vmatpush1.bf16.msra.mxu0 0
    %339 = vmatprep.subr.bf16.mxu0 0
    %340 = vmatpush1.bf16.msra.mxu0 0
    %341 = vmatprep.subr.bf16.mxu0 0
    %342 = vmatpush1.bf16.msra.mxu0 0
    %343 = vmatprep.subr.bf16.mxu0 0
    %344 = vmatpush1.bf16.msra.mxu0 0
    %345 = vmatprep.subr.bf16.mxu0 0
    %346 = vmatpush1.bf16.msra.mxu0 0
    %347 = vmatprep.subr.bf16.mxu0 0
    %348 = vmatpush1.bf16.msra.mxu0 0
    %349 = vmatprep.mubr.bf16.mxu0 0
    %350 = vmatmul.mubr.bf16.gmra.mrb[0].mxu0 %v144
    %v351 = vpop.f32.mrb[0].mxu0
    %v352 = vadd.f32 %v136, %v351
    %v353 = vpop.f32.mrb[0].mxu0
    %v354 = vpop.f32.mrb[0].mxu0
    %v355 = vadd.f32 %v136, %v354
    %v356 = vpop.f32.mrb[0].mxu0
    %357 = vdwg.mxu0
    %v358 = vld [vmem:[#allocation8] sm:$0xff]
    %v359 = vld [vmem:[#allocation8 + $0x8] sm:$0xf]
    %v360 = vld [vmem:[#allocation8 + $0xc] sm:$0xff]
    %v361 = vld [vmem:[#allocation8 + $0x14] sm:$0xf]
    %v362 = vld [vmem:[#allocation8 + $0x18] sm:$0xff]
    %v363 = vld [vmem:[#allocation8 + $0x20] sm:$0xf]
    %v364 = vld [vmem:[#allocation8 + $0x24] sm:$0xff]
    %v365 = vld [vmem:[#allocation8 + $0x2c] sm:$0xf]
    %v366 = vld [vmem:[#allocation8 + $0x30] sm:$0xff]
    %v367 = vld [vmem:[#allocation8 + $0x38] sm:$0xf]
    %v368 = vld [vmem:[#allocation8 + $0x3c] sm:$0xff]
    %v369 = vld [vmem:[#allocation8 + $0x44] sm:$0xf]
    %v370 = vld [vmem:[#allocation8 + $0x48] sm:$0xff]
    %v371 = vld [vmem:[#allocation8 + $0x50] sm:$0xf]
    %v372 = vld [vmem:[#allocation8 + $0x54] sm:$0xff]
    %v373 = vld [vmem:[#allocation8 + $0x5c] sm:$0xf]
    %v374 = vld [vmem:[#allocation8 + $0x60] sm:$0xff]
    %v375 = vld [vmem:[#allocation8 + $0x68] sm:$0xf]
    %v376 = vld [vmem:[#allocation8 + $0x6c] sm:$0xff]
    %v377 = vld [vmem:[#allocation8 + $0x74] sm:$0xf]
    %v378 = vld [vmem:[#allocation8 + $0x78] sm:$0xff]
    %v379 = vld [vmem:[#allocation8 + $0x80] sm:$0xf]
    %v380 = vld [vmem:[#allocation8 + $0x84] sm:$0xff]
    %v381 = vld [vmem:[#allocation8 + $0x8c] sm:$0xf]
    %v382 = vld [vmem:[#allocation8 + $0x90] sm:$0xff]
    %v383 = vld [vmem:[#allocation8 + $0x98] sm:$0xf]
    %v384 = vld [vmem:[#allocation8 + $0x9c] sm:$0xff]
    %v385 = vld [vmem:[#allocation8 + $0xa4] sm:$0xf]
    %v386 = vld [vmem:[#allocation8 + $0xa8] sm:$0xff]
    %v387 = vld [vmem:[#allocation8 + $0xb0] sm:$0xf]
    %v388 = vld [vmem:[#allocation8 + $0xb4] sm:$0xff]
    %v389 = vld [vmem:[#allocation8 + $0xbc] sm:$0xf]
    %v390 = vld [vmem:[%s4] sm:$0x7]
    %v392 = vlaneseq
    %v393 = vshrl.u32 %v392, 7
    %v394 = vsub.s32 0, %v393
    %v395 = vrot.slane %v390, %v394
    %v396 = vlaneseq
    %v397 = vshrl.u32 %v396, 7
    %v398 = vsub.s32 1, %v397
    %v399 = vrot.slane %v390, %v398
    %v400 = vlaneseq
    %v401 = vshrl.u32 %v400, 7
    %v402 = vsub.s32 2, %v401
    %v403 = vrot.slane %v390, %v402
    %v439 = vunpack.c.l.b16 %v358
    %v440 = vunpack.c.h.b16 %v358
    %v441 = vunpack.c.l.b16 %v359
    %v442 = vunpack.c.l.b16 %v360
    %v443 = vunpack.c.h.b16 %v360
    %v444 = vunpack.c.l.b16 %v361
    %v445 = vunpack.c.l.b16 %v362
    %v446 = vunpack.c.h.b16 %v362
    %v447 = vunpack.c.l.b16 %v363
    %v448 = vunpack.c.l.b16 %v364
    %v449 = vunpack.c.h.b16 %v364
    %v450 = vunpack.c.l.b16 %v365
    %v451 = vunpack.c.l.b16 %v366
    %v452 = vunpack.c.h.b16 %v366
    %v453 = vunpack.c.l.b16 %v367
    %v454 = vunpack.c.l.b16 %v368
    %v455 = vunpack.c.h.b16 %v368
    %v456 = vunpack.c.l.b16 %v369
    %v457 = vunpack.c.l.b16 %v370
    %v458 = vunpack.c.h.b16 %v370
    %v459 = vunpack.c.l.b16 %v371
    %v460 = vunpack.c.l.b16 %v372
    %v461 = vunpack.c.h.b16 %v372
    %v462 = vunpack.c.l.b16 %v373
    %v463 = vunpack.c.l.b16 %v374
    %v464 = vunpack.c.h.b16 %v374
    %v465 = vunpack.c.l.b16 %v375
    %v466 = vunpack.c.l.b16 %v376
    %v467 = vunpack.c.h.b16 %v376
    %v468 = vunpack.c.l.b16 %v377
    %v469 = vunpack.c.l.b16 %v378
    %v470 = vunpack.c.h.b16 %v378
    %v471 = vunpack.c.l.b16 %v379
    %v472 = vunpack.c.l.b16 %v380
    %v473 = vunpack.c.h.b16 %v380
    %v474 = vunpack.c.l.b16 %v381
    %v475 = vunpack.c.l.b16 %v382
    %v476 = vunpack.c.h.b16 %v382
    %v477 = vunpack.c.l.b16 %v383
    %v478 = vunpack.c.l.b16 %v384
    %v479 = vunpack.c.h.b16 %v384
    %v480 = vunpack.c.l.b16 %v385
    %v481 = vunpack.c.l.b16 %v386
    %v482 = vunpack.c.h.b16 %v386
    %v483 = vunpack.c.l.b16 %v387
    %v484 = vunpack.c.l.b16 %v388
    %v485 = vunpack.c.h.b16 %v388
    %v486 = vunpack.c.l.b16 %v389
    %v487 = vpack.c.b16 %v442, %v439
    %v488 = vpack.c.b16 %v443, %v440
    %v489 = vpack.c.b16 %v444, %v441
    %v490 = vpack.c.b16 %v448, %v445
    %v491 = vpack.c.b16 %v449, %v446
    %v492 = vpack.c.b16 %v450, %v447
    %v493 = vpack.c.b16 %v454, %v451
    %v494 = vpack.c.b16 %v455, %v452
    %v495 = vpack.c.b16 %v456, %v453
    %v496 = vpack.c.b16 %v460, %v457
    %v497 = vpack.c.b16 %v461, %v458
    %v498 = vpack.c.b16 %v462, %v459
    %v499 = vpack.c.b16 %v466, %v463
    %v500 = vpack.c.b16 %v467, %v464
    %v501 = vpack.c.b16 %v468, %v465
    %v502 = vpack.c.b16 %v472, %v469
    %v503 = vpack.c.b16 %v473, %v470
    %v504 = vpack.c.b16 %v474, %v471
    %v505 = vpack.c.b16 %v478, %v475
    %v506 = vpack.c.b16 %v479, %v476
    %v507 = vpack.c.b16 %v480, %v477
    %v508 = vpack.c.b16 %v484, %v481
    %v509 = vpack.c.b16 %v485, %v482
    %v510 = vpack.c.b16 %v486, %v483
    %535 = vmatprep.subr.bf16.mxu0 %v488
    %536 = vmatpush1.bf16.msra.mxu0 %v487
    %537 = vmatprep.subr.bf16.mxu0 %v491
    %538 = vmatpush1.bf16.msra.mxu0 %v490
    %539 = vmatprep.subr.bf16.mxu0 %v494
    %540 = vmatpush1.bf16.msra.mxu0 %v493
    %541 = vmatprep.subr.bf16.mxu0 %v497
    %542 = vmatpush1.bf16.msra.mxu0 %v496
    %543 = vmatprep.subr.bf16.mxu0 %v500
    %544 = vmatpush1.bf16.msra.mxu0 %v499
    %545 = vmatprep.subr.bf16.mxu0 %v503
    %546 = vmatpush1.bf16.msra.mxu0 %v502
    %547 = vmatprep.subr.bf16.mxu0 %v506
    %548 = vmatpush1.bf16.msra.mxu0 %v505
    %549 = vmatprep.subr.bf16.mxu0 %v509
    %550 = vmatpush1.bf16.msra.mxu0 %v508
    %551 = vmatprep.subr.bf16.mxu0 0
    %552 = vmatpush1.bf16.msra.mxu0 0
    %553 = vmatprep.subr.bf16.mxu0 0
    %554 = vmatpush1.bf16.msra.mxu0 0
    %555 = vmatprep.subr.bf16.mxu0 0
    %556 = vmatpush1.bf16.msra.mxu0 0
    %557 = vmatprep.subr.bf16.mxu0 0
    %558 = vmatpush1.bf16.msra.mxu0 0
    %559 = vmatprep.subr.bf16.mxu0 0
    %560 = vmatpush1.bf16.msra.mxu0 0
    %561 = vmatprep.subr.bf16.mxu0 0
    %562 = vmatpush1.bf16.msra.mxu0 0
    %563 = vmatprep.subr.bf16.mxu0 0
    %564 = vmatpush1.bf16.msra.mxu0 0
    %565 = vmatprep.subr.bf16.mxu0 0
    %566 = vmatpush1.bf16.msra.mxu0 0
    %567 = vmatprep.mubr.bf16.mxu0 0
    %568 = vmatmul.mubr.bf16.gmra.mrb[0].mxu0 %v144
    %v569 = vpop.f32.mrb[0].mxu0
    %v570 = vadd.f32 %v395, %v569
    %v571 = vpop.f32.mrb[0].mxu0
    %v572 = vadd.f32 %v399, %v571
    %v573 = vpop.f32.mrb[0].mxu0
    %v574 = vadd.f32 %v395, %v573
    %v575 = vpop.f32.mrb[0].mxu0
    %v576 = vadd.f32 %v399, %v575
    %577 = vdwg.mxu0
    %578 = vmatprep.subr.bf16.mxu0 0
    %579 = vmatpush1.bf16.msra.mxu0 %v489
    %580 = vmatprep.subr.bf16.mxu0 0
    %581 = vmatpush1.bf16.msra.mxu0 %v492
    %582 = vmatprep.subr.bf16.mxu0 0
    %583 = vmatpush1.bf16.msra.mxu0 %v495
    %584 = vmatprep.subr.bf16.mxu0 0
    %585 = vmatpush1.bf16.msra.mxu0 %v498
    %586 = vmatprep.subr.bf16.mxu0 0
    %587 = vmatpush1.bf16.msra.mxu0 %v501
    %588 = vmatprep.subr.bf16.mxu0 0
    %589 = vmatpush1.bf16.msra.mxu0 %v504
    %590 = vmatprep.subr.bf16.mxu0 0
    %591 = vmatpush1.bf16.msra.mxu0 %v507
    %592 = vmatprep.subr.bf16.mxu0 0
    %593 = vmatpush1.bf16.msra.mxu0 %v510
    %594 = vmatprep.subr.bf16.mxu0 0
    %595 = vmatpush1.bf16.msra.mxu0 0
    %596 = vmatprep.subr.bf16.mxu0 0
    %597 = vmatpush1.bf16.msra.mxu0 0
    %598 = vmatprep.subr.bf16.mxu0 0
    %599 = vmatpush1.bf16.msra.mxu0 0
    %600 = vmatprep.subr.bf16.mxu0 0
    %601 = vmatpush1.bf16.msra.mxu0 0
    %602 = vmatprep.subr.bf16.mxu0 0
    %603 = vmatpush1.bf16.msra.mxu0 0
    %604 = vmatprep.subr.bf16.mxu0 0
    %605 = vmatpush1.bf16.msra.mxu0 0
    %606 = vmatprep.subr.bf16.mxu0 0
    %607 = vmatpush1.bf16.msra.mxu0 0
    %608 = vmatprep.subr.bf16.mxu0 0
    %609 = vmatpush1.bf16.msra.mxu0 0
    %610 = vmatprep.mubr.bf16.mxu0 0
    %611 = vmatmul.mubr.bf16.gmra.mrb[0].mxu0 %v144
    %v612 = vpop.f32.mrb[0].mxu0
    %v613 = vadd.f32 %v403, %v612
    %v614 = vpop.f32.mrb[0].mxu0
    %v615 = vpop.f32.mrb[0].mxu0
    %v616 = vadd.f32 %v403, %v615
    %v617 = vpop.f32.mrb[0].mxu0
    %618 = vdwg.mxu0
    %v619 = vxor.u32 %v309, 2147483648
    %v620 = vxor.u32 %v311, 2147483648
    %v621 = vxor.u32 %v352, 2147483648
    %v622 = vxor.u32 %v313, 2147483648
    %v623 = vxor.u32 %v315, 2147483648
    %v624 = vxor.u32 %v355, 2147483648
    %v625 = vmul.f32 %v619, 1.442695
    %v626 = vpow.pop %v625
    %v627 = vmul.f32 %v620, 1.442695
    %v628 = vpow.pop %v627
    %v629 = vmul.f32 %v621, 1.442695
    %v630 = vpow.pop %v629
    %v631 = vmul.f32 %v622, 1.442695
    %v632 = vpow.pop %v631
    %v633 = vmul.f32 %v623, 1.442695
    %v634 = vpow.pop %v633
    %v635 = vmul.f32 %v624, 1.442695
    %v636 = vpow.pop %v635
    %v637 = vadd.f32 %v626, 1.0
    %v638 = vadd.f32 %v628, 1.0
    %v639 = vadd.f32 %v630, 1.0
    %v640 = vadd.f32 %v632, 1.0
    %v641 = vadd.f32 %v634, 1.0
    %v642 = vadd.f32 %v636, 1.0
    %v643 = vrcp.pop %v637
    %v644 = vmul.f32 1.0, %v643
    %v645 = vrcp.pop %v638
    %v646 = vmul.f32 1.0, %v645
    %v647 = vrcp.pop %v639
    %v648 = vmul.f32 1.0, %v647
    %v649 = vrcp.pop %v640
    %v650 = vmul.f32 1.0, %v649
    %v651 = vrcp.pop %v641
    %v652 = vmul.f32 1.0, %v651
    %v653 = vrcp.pop %v642
    %v654 = vmul.f32 1.0, %v653
    %v655 = vmul.f32 %v309, %v644
    %v656 = vmul.f32 %v311, %v646
    %v657 = vmul.f32 %v352, %v648
    %v658 = vmul.f32 %v313, %v650
    %v659 = vmul.f32 %v315, %v652
    %v660 = vmul.f32 %v355, %v654
    %v661 = vmul.f32 %v655, %v570
    %v662 = vmul.f32 %v656, %v572
    %v663 = vmul.f32 %v657, %v613
    %v664 = vmul.f32 %v658, %v574
    %v665 = vmul.f32 %v659, %v576
    %v666 = vmul.f32 %v660, %v616
    %v667 = vld [vmem:[#allocation2] sm:$0xff]
    %v668 = vld [vmem:[#allocation2 + $0x8] sm:$0xff]
    %v669 = vpack.c.bf16 %v664, %v661
    %v670 = vpack.c.bf16 %v665, %v662
    %v671 = vpack.c.bf16 %v666, %v663
    %v672 = vld [vmem:[#allocation9] sm:$0xf]
    %v673 = vld [vmem:[#allocation9 + $0x4] sm:$0xf]
    %v674 = vld [vmem:[#allocation9 + $0x8] sm:$0xf]
    %v675 = vld [vmem:[#allocation9 + $0xc] sm:$0xf]
    %v676 = vld [vmem:[#allocation9 + $0x10] sm:$0xf]
    %v677 = vld [vmem:[#allocation9 + $0x14] sm:$0xf]
    %v678 = vld [vmem:[#allocation9 + $0x18] sm:$0xf]
    %v679 = vld [vmem:[#allocation9 + $0x1c] sm:$0xf]
    %v680 = vld [vmem:[#allocation9 + $0x20] sm:$0xf]
    %v681 = vld [vmem:[#allocation9 + $0x24] sm:$0xf]
    %v682 = vld [vmem:[#allocation9 + $0x28] sm:$0xf]
    %v683 = vld [vmem:[#allocation9 + $0x2c] sm:$0xf]
    %v684 = vld [vmem:[#allocation9 + $0x30] sm:$0xf]
    %v685 = vld [vmem:[#allocation9 + $0x34] sm:$0xf]
    %v686 = vld [vmem:[#allocation9 + $0x38] sm:$0xf]
    %v687 = vld [vmem:[#allocation9 + $0x3c] sm:$0xf]
    %v688 = vld [vmem:[#allocation9 + $0x40] sm:$0xf]
    %v689 = vld [vmem:[#allocation9 + $0x44] sm:$0xf]
    %v690 = vld [vmem:[#allocation9 + $0x48] sm:$0xf]
    %v691 = vld [vmem:[#allocation9 + $0x4c] sm:$0xf]
    %v692 = vld [vmem:[#allocation9 + $0x50] sm:$0xf]
    %v693 = vld [vmem:[#allocation9 + $0x54] sm:$0xf]
    %v694 = vld [vmem:[#allocation9 + $0x58] sm:$0xf]
    %v695 = vld [vmem:[#allocation9 + $0x5c] sm:$0xf]
    %v696 = vld [vmem:[#allocation9 + $0x60] sm:$0xf]
    %v697 = vld [vmem:[#allocation9 + $0x64] sm:$0xf]
    %v698 = vld [vmem:[#allocation9 + $0x68] sm:$0xf]
    %v699 = vld [vmem:[#allocation9 + $0x6c] sm:$0xf]
    %v700 = vld [vmem:[#allocation9 + $0x70] sm:$0xf]
    %v701 = vld [vmem:[#allocation9 + $0x74] sm:$0xf]
    %v702 = vld [vmem:[#allocation9 + $0x78] sm:$0xf]
    %v703 = vld [vmem:[#allocation9 + $0x7c] sm:$0xf]
    %v704 = vld [vmem:[#allocation9 + $0x80] sm:$0xf]
    %v705 = vld [vmem:[#allocation9 + $0x84] sm:$0xf]
    %v706 = vld [vmem:[#allocation9 + $0x88] sm:$0xf]
    %v707 = vld [vmem:[#allocation9 + $0x8c] sm:$0xf]
    %v708 = vld [vmem:[#allocation9 + $0x90] sm:$0xf]
    %v709 = vld [vmem:[#allocation9 + $0x94] sm:$0xf]
    %v710 = vld [vmem:[#allocation9 + $0x98] sm:$0xf]
    %v711 = vld [vmem:[#allocation9 + $0x9c] sm:$0xf]
    %v712 = vld [vmem:[#allocation9 + $0xa0] sm:$0xf]
    %v713 = vld [vmem:[#allocation9 + $0xa4] sm:$0xf]
    %v714 = vld [vmem:[#allocation9 + $0xa8] sm:$0xf]
    %v715 = vld [vmem:[#allocation9 + $0xac] sm:$0xf]
    %v716 = vld [vmem:[#allocation9 + $0xb0] sm:$0xf]
    %v717 = vld [vmem:[#allocation9 + $0xb4] sm:$0xf]
    %v718 = vld [vmem:[#allocation9 + $0xb8] sm:$0xf]
    %v719 = vld [vmem:[#allocation9 + $0xbc] sm:$0xf]
    %v768 = vunpack.c.l.b16 %v672
    %v769 = vunpack.c.l.b16 %v673
    %v770 = vunpack.c.l.b16 %v674
    %v771 = vunpack.c.l.b16 %v675
    %v772 = vunpack.c.l.b16 %v676
    %v773 = vunpack.c.l.b16 %v677
    %v774 = vunpack.c.l.b16 %v678
    %v775 = vunpack.c.l.b16 %v679
    %v776 = vunpack.c.l.b16 %v680
    %v777 = vunpack.c.l.b16 %v681
    %v778 = vunpack.c.l.b16 %v682
    %v779 = vunpack.c.l.b16 %v683
    %v780 = vunpack.c.l.b16 %v684
    %v781 = vunpack.c.l.b16 %v685
    %v782 = vunpack.c.l.b16 %v686
    %v783 = vunpack.c.l.b16 %v687
    %v784 = vunpack.c.l.b16 %v688
    %v785 = vunpack.c.l.b16 %v689
    %v786 = vunpack.c.l.b16 %v690
    %v787 = vunpack.c.l.b16 %v691
    %v788 = vunpack.c.l.b16 %v692
    %v789 = vunpack.c.l.b16 %v693
    %v790 = vunpack.c.l.b16 %v694
    %v791 = vunpack.c.l.b16 %v695
    %v792 = vunpack.c.l.b16 %v696
    %v793 = vunpack.c.l.b16 %v697
    %v794 = vunpack.c.l.b16 %v698
    %v795 = vunpack.c.l.b16 %v699
    %v796 = vunpack.c.l.b16 %v700
    %v797 = vunpack.c.l.b16 %v701
    %v798 = vunpack.c.l.b16 %v702
    %v799 = vunpack.c.l.b16 %v703
    %v800 = vunpack.c.l.b16 %v704
    %v801 = vunpack.c.l.b16 %v705
    %v802 = vunpack.c.l.b16 %v706
    %v803 = vunpack.c.l.b16 %v707
    %v804 = vunpack.c.l.b16 %v708
    %v805 = vunpack.c.l.b16 %v709
    %v806 = vunpack.c.l.b16 %v710
    %v807 = vunpack.c.l.b16 %v711
    %v808 = vunpack.c.l.b16 %v712
    %v809 = vunpack.c.l.b16 %v713
    %v810 = vunpack.c.l.b16 %v714
    %v811 = vunpack.c.l.b16 %v715
    %v812 = vunpack.c.l.b16 %v716
    %v813 = vunpack.c.l.b16 %v717
    %v814 = vunpack.c.l.b16 %v718
    %v815 = vunpack.c.l.b16 %v719
    %v816 = vpack.c.b16 %v769, %v768
    %v817 = vpack.c.b16 %v771, %v770
    %v818 = vpack.c.b16 %v773, %v772
    %v819 = vpack.c.b16 %v775, %v774
    %v820 = vpack.c.b16 %v777, %v776
    %v821 = vpack.c.b16 %v779, %v778
    %v822 = vpack.c.b16 %v781, %v780
    %v823 = vpack.c.b16 %v783, %v782
    %v824 = vpack.c.b16 %v785, %v784
    %v825 = vpack.c.b16 %v787, %v786
    %v826 = vpack.c.b16 %v789, %v788
    %v827 = vpack.c.b16 %v791, %v790
    %v828 = vpack.c.b16 %v793, %v792
    %v829 = vpack.c.b16 %v795, %v794
    %v830 = vpack.c.b16 %v797, %v796
    %v831 = vpack.c.b16 %v799, %v798
    %v832 = vpack.c.b16 %v801, %v800
    %v833 = vpack.c.b16 %v803, %v802
    %v834 = vpack.c.b16 %v805, %v804
    %v835 = vpack.c.b16 %v807, %v806
    %v836 = vpack.c.b16 %v809, %v808
    %v837 = vpack.c.b16 %v811, %v810
    %v838 = vpack.c.b16 %v813, %v812
    %v839 = vpack.c.b16 %v815, %v814
    %864 = vmatprep.subr.bf16.mxu0 0
    %865 = vmatpush1.bf16.msra.mxu0 %v816
    %866 = vmatprep.subr.bf16.mxu0 0
    %867 = vmatpush1.bf16.msra.mxu0 %v817
    %868 = vmatprep.subr.bf16.mxu0 0
    %869 = vmatpush1.bf16.msra.mxu0 %v818
    %870 = vmatprep.subr.bf16.mxu0 0
    %871 = vmatpush1.bf16.msra.mxu0 %v819
    %872 = vmatprep.subr.bf16.mxu0 0
    %873 = vmatpush1.bf16.msra.mxu0 %v820
    %874 = vmatprep.subr.bf16.mxu0 0
    %875 = vmatpush1.bf16.msra.mxu0 %v821
    %876 = vmatprep.subr.bf16.mxu0 0
    %877 = vmatpush1.bf16.msra.mxu0 %v822
    %878 = vmatprep.subr.bf16.mxu0 0
    %879 = vmatpush1.bf16.msra.mxu0 %v823
    %880 = vmatprep.subr.bf16.mxu0 0
    %881 = vmatpush1.bf16.msra.mxu0 %v824
    %882 = vmatprep.subr.bf16.mxu0 0
    %883 = vmatpush1.bf16.msra.mxu0 %v825
    %884 = vmatprep.subr.bf16.mxu0 0
    %885 = vmatpush1.bf16.msra.mxu0 %v826
    %886 = vmatprep.subr.bf16.mxu0 0
    %887 = vmatpush1.bf16.msra.mxu0 %v827
    %888 = vmatprep.subr.bf16.mxu0 0
    %889 = vmatpush1.bf16.msra.mxu0 %v828
    %890 = vmatprep.subr.bf16.mxu0 0
    %891 = vmatpush1.bf16.msra.mxu0 %v829
    %892 = vmatprep.subr.bf16.mxu0 0
    %893 = vmatpush1.bf16.msra.mxu0 %v830
    %894 = vmatprep.subr.bf16.mxu0 0
    %895 = vmatpush1.bf16.msra.mxu0 %v831
    %896 = vmatprep.mubr.bf16.mxu0 %v670
    %897 = vmatmul.mubr.bf16.gmra.mrb[0].mxu0 %v669
    %v898 = vpop.f32.mrb[0].mxu0
    %v899 = vadd.f32 0.0, %v898
    %v900 = vpop.f32.mrb[0].mxu0
    %v901 = vpop.f32.mrb[0].mxu0
    %v902 = vadd.f32 0.0, %v901
    %v903 = vpop.f32.mrb[0].mxu0
    %904 = vdwg.mxu0
    %905 = vmatprep.subr.bf16.mxu0 0
    %906 = vmatpush1.bf16.msra.mxu0 %v832
    %907 = vmatprep.subr.bf16.mxu0 0
    %908 = vmatpush1.bf16.msra.mxu0 %v833
    %909 = vmatprep.subr.bf16.mxu0 0
    %910 = vmatpush1.bf16.msra.mxu0 %v834
    %911 = vmatprep.subr.bf16.mxu0 0
    %912 = vmatpush1.bf16.msra.mxu0 %v835
    %913 = vmatprep.subr.bf16.mxu0 0
    %914 = vmatpush1.bf16.msra.mxu0 %v836
    %915 = vmatprep.subr.bf16.mxu0 0
    %916 = vmatpush1.bf16.msra.mxu0 %v837
    %917 = vmatprep.subr.bf16.mxu0 0
    %918 = vmatpush1.bf16.msra.mxu0 %v838
    %919 = vmatprep.subr.bf16.mxu0 0
    %920 = vmatpush1.bf16.msra.mxu0 %v839
    %921 = vmatprep.subr.bf16.mxu0 0
    %922 = vmatpush1.bf16.msra.mxu0 0
    %923 = vmatprep.subr.bf16.mxu0 0
    %924 = vmatpush1.bf16.msra.mxu0 0
    %925 = vmatprep.subr.bf16.mxu0 0
    %926 = vmatpush1.bf16.msra.mxu0 0
    %927 = vmatprep.subr.bf16.mxu0 0
    %928 = vmatpush1.bf16.msra.mxu0 0
    %929 = vmatprep.subr.bf16.mxu0 0
    %930 = vmatpush1.bf16.msra.mxu0 0
    %931 = vmatprep.subr.bf16.mxu0 0
    %932 = vmatpush1.bf16.msra.mxu0 0
    %933 = vmatprep.subr.bf16.mxu0 0
    %934 = vmatpush1.bf16.msra.mxu0 0
    %935 = vmatprep.subr.bf16.mxu0 0
    %936 = vmatpush1.bf16.msra.mxu0 0
    %937 = vmatprep.mubr.bf16.mxu0 0
    %938 = vmatmul.mubr.bf16.gmra.mrb[0].mxu0 %v671
    %v939 = vpop.f32.mrb[0].mxu0
    %v940 = vadd.f32 %v899, %v939
    %v941 = vpop.f32.mrb[0].mxu0
    %v942 = vpop.f32.mrb[0].mxu0
    %v943 = vadd.f32 %v902, %v942
    %v944 = vpop.f32.mrb[0].mxu0
    %945 = vdwg.mxu0
    %v946 = vadd.f32 %v667, %v940
    %v947 = vadd.f32 %v668, %v943
    %948 = vst [vmem:[#allocation2] sm:$0xff] %v946
    %949 = vst [vmem:[#allocation2 + $0x8] sm:$0xff] %v947
    // Predicated region
    $region50: #{tpu_custom_call.1} parent=1 // pred_check
      %p950 = pneg %p83
    $region51: #{tpu_custom_call.1} parent=1 // pred_check_branch
      %952 = sbr.rel (%p950) target = $region53
    $region52: #{tpu_custom_call.1} parent=1 // pred_region
      %v953 = vld [vmem:[#allocation2] sm:$0xff]
      %v954 = vld [vmem:[#allocation2 + $0x8] sm:$0xff]
      %v955 = vld [vmem:[%s6] sm:$0x1]
      %v957 = vlaneseq
      %v958 = vshrl.u32 %v957, 7
      %v959 = vsub.s32 0, %v958
      %v960 = vrot.slane %v955, %v959
      %v962 = vadd.f32 %v953, %v960
      %v963 = vadd.f32 %v954, %v960
      %964 = vst [vmem:[#allocation11] sm:$0xff] %v962
      %965 = vst [vmem:[#allocation11 + $0x8] sm:$0xff] %v963
    $region53: #{tpu_custom_call.1} parent=1 // pred_fallthru
      _
    // Predicated region
    $region54: #{tpu_custom_call.1} parent=1 // pred_check
      _
    $region55: #{tpu_custom_call.1} parent=1 // pred_check_branch
      %967 = sbr.rel (0) target = $region57
    $region56: #{tpu_custom_call.1} parent=1 // pred_region
      %s969 = ssub.s32 256, 256
      %970 = vsyncadd [#allocation5], %s969
      %s971 = sshll.u32 [#allocation11], 4
      %s972 = int_to_ptr.vmem [resolvable:$true] %s971
      %977 = dma.vmem_to_hbm [thread:$0]  %s972, 256, %s7, [#allocation5], 128, 128, 8
    $region57: #{tpu_custom_call.1} parent=1 // pred_fallthru
      _
    // Predicated region
    $region58: #{tpu_custom_call.1} parent=1 // pred_check
      _
    $region59: #{tpu_custom_call.1} parent=1 // pred_check_branch
      %979 = sbr.rel (0) target = $region61
    $region60: #{tpu_custom_call.1} parent=1 // pred_region
      %980 = dma.done [#allocation5], 256
    $region61: #{tpu_custom_call.1} parent=1 // pred_fallthru
      _
    %981 = vsyncpa [#allocation4], 1
    %982 = vsyncpa [#allocation7], 1
    %983 = vsyncpa [#allocation10], 1
    %984 = vsyncpa [#allocation5], 1

</llo_original>
